<compile_context>
chip_gen: v7x
topology: tpu7x:2x2x1
jax: 0.10.0
libtpu: 0.0.40
codegen_flags: <defaults>
</compile_context>

<pallas_src>
import jax
import jax.numpy as jnp
from jax import lax
from jax.experimental import pallas as pl
from jax.experimental.pallas import tpu as pltpu


# ----------------------------- Fused Pallas kernel ---------------------------

def _pad_store(pad_ref, y):
    """Write y into the interior of pad_ref and zero ONLY the 1-pixel halo."""
    Nb, Hp, Wp, C = pad_ref.shape
    H2, W2 = Hp - 2, Wp - 2
    zrow = jnp.zeros((Nb, 1, Wp, C), jnp.float32)
    pad_ref[:, pl.ds(0, 1), :, :] = zrow                    # top halo row
    pad_ref[:, pl.ds(H2 + 1, 1), :, :] = zrow               # bottom halo row
    zcol = jnp.zeros((Nb, H2, 1, C), jnp.float32)
    pad_ref[:, pl.ds(1, H2), pl.ds(0, 1), :] = zcol         # left halo col
    pad_ref[:, pl.ds(1, H2), pl.ds(W2 + 1, 1), :] = zcol    # right halo col
    pad_ref[:, pl.ds(1, H2), pl.ds(1, W2), :] = y           # interior (fully rewritten)


def _conv3x3_bn_relu(pad_ref, y, w_ref, shift_ref):
    """'same' 3x3 conv as a single im2col matmul, + folded-BN shift + ReLU.

    pad_ref  : (Nb, H2+2, W2+2, C) f32 VMEM scratch
    y        : (Nb, H2, W2, C) f32 activation to convolve
    w_ref    : (9*C, Cout) weights (BN scale already folded in), compute dtype
    shift_ref: (1, Cout) f32 folded-BN shift
    returns  : (Nb*H2*W2, Cout) f32
    """
    Nb, Hp, Wp, C = pad_ref.shape
    H2, W2 = Hp - 2, Wp - 2
    _pad_store(pad_ref, y)
    # im2col along K: tap order (dy-major, dx, channel) matches the HWIO weight reshape.
    cols = jnp.concatenate(
        [pad_ref[:, pl.ds(dy, H2), pl.ds(dx, W2), :]
         for dy in range(3) for dx in range(3)], axis=-1)          # (Nb, H2, W2, 9*C)
    acc = jnp.dot(cols.reshape(Nb * H2 * W2, 9 * C).astype(w_ref.dtype), w_ref[...],
                  preferred_element_type=jnp.float32)              # one long-K matmul
    return jnp.maximum(acc + shift_ref[...], 0.0)


def _down_fused_kernel(x_ref, w1_ref, b1_ref, wA_ref, tA_ref, wB_ref, tB_ref,
                       o_ref, pad1_ref, pad2_ref):
    """Fused Down forward for Nb images (one grid step).

    x_ref : (Nb, H2, 2, W2, 2*Cin) input; H split into (H2, 2); the two W-neighbours
            of every 2x2 window are packed into lanes ([0:Cin]=even col, [Cin:]=odd).
    w1_ref: (3*Cin, Cin)  stacked [Wm ; 0.25*Wa ; 0.25*Wa]  (pool+concat+1x1 fused)
    b1_ref: (1, Cin) f32
    wA_ref: (9*Cin, Cout)  conv3x3 #1, BN scale folded; tA_ref: (1, Cout) shift
    wB_ref: (9*Cout, Cout) conv3x3 #2, BN scale folded; tB_ref: (1, Cout) shift
    o_ref : (Nb, H2*W2, Cout) f32
    """
    Nb = x_ref.shape[0]
    H2 = x_ref.shape[1]
    W2 = x_ref.shape[3]
    Cin = x_ref.shape[4] // 2
    Cout = tA_ref.shape[1]
    M = Nb * H2 * W2

    # ---- stage 1: 2x2 max-pool + avg-pool + 1x1 conv, all in ONE matmul ----
    xx = x_ref[...]                                    # (Nb, H2, 2, W2, 2*Cin)
    r0 = xx[:, :, 0, :, :]                             # even input rows
    r1 = xx[:, :, 1, :, :]                             # odd  input rows
    m01 = jnp.maximum(r0, r1)
    mx = jnp.maximum(m01[..., :Cin], m01[..., Cin:])   # 2x2 max pool  (Nb,H2,W2,Cin)
    feat = jnp.concatenate([mx, r0 + r1], axis=-1)     # [max | column-pair sums]
    y1 = (jnp.dot(feat.reshape(M, 3 * Cin), w1_ref[...],
                  preferred_element_type=jnp.float32)
          + b1_ref[...])                               # (M, Cin) f32

    # ---- stage 2 & 3: conv3x3 + folded-BN + ReLU, intermediates stay in VMEM ----
    y2 = _conv3x3_bn_relu(pad1_ref, y1.reshape(Nb, H2, W2, Cin), wA_ref, tA_ref)
    y3 = _conv3x3_bn_relu(pad2_ref, y2.reshape(Nb, H2, W2, Cout), wB_ref, tB_ref)

    o_ref[...] = y3.reshape(Nb, H2 * W2, Cout)


# ---------------------------------- Wrapper ----------------------------------

def down_forward(x_nchw, p, *, compute_dtype=jnp.float32, images_per_step=1):
    N, Cin, H, W = x_nchw.shape
    H2, W2 = H // 2, W // 2
    Cout = p["wc1"].shape[-1]
    Nb = images_per_step
    assert N % Nb == 0

    # NCHW -> NHWC at the module boundary only.
    x = jnp.transpose(x_nchw, (0, 2, 3, 1))[:, :2 * H2, :2 * W2, :]
    # Free contiguous reshape exposing the 2x2 window structure:
    #   H -> (H2, 2)  and  (W, C) -> (W2, 2*Cin).
    x6 = x.reshape(N, H2, 2, W2, 2 * Cin).astype(compute_dtype)

    # conv1x1(cat([max, avg], C)) == [max | (r0+r1)] @ [Wm ; 0.25*Wa ; 0.25*Wa] + b
    wm, wa = p["w1"][:Cin], p["w1"][Cin:]
    w1 = jnp.concatenate([wm, 0.25 * wa, 0.25 * wa], axis=0).astype(compute_dtype)

    # Fold BN scale into the conv weights (exact: (x @ W) * s == x @ (W * s)).
    wA = (p["wc1"] * p["scale1"][0]).reshape(9 * Cin, Cout).astype(compute_dtype)
    wB = (p["wc2"] * p["scale2"][0]).reshape(9 * Cout, Cout).astype(compute_dtype)

    itemsize = jnp.dtype(compute_dtype).itemsize
    flops = 2 * N * H2 * W2 * (3 * Cin * Cin + 9 * Cin * Cout + 9 * Cout * Cout)
    bytes_accessed = (x6.size * itemsize + N * H2 * W2 * Cout * 4
                      + (w1.size + wA.size + wB.size) * itemsize
                      + (Cin + 2 * Cout) * 4)

    out = pl.pallas_call(
        _down_fused_kernel,
        out_shape=jax.ShapeDtypeStruct((N, H2 * W2, Cout), jnp.float32),
        grid=(N // Nb,),
        in_specs=[
            pl.BlockSpec((Nb, H2, 2, W2, 2 * Cin), lambda n: (n, 0, 0, 0, 0)),
            pl.BlockSpec((3 * Cin, Cin), lambda n: (0, 0)),
            pl.BlockSpec((1, Cin), lambda n: (0, 0)),
            pl.BlockSpec((9 * Cin, Cout), lambda n: (0, 0)),
            pl.BlockSpec((1, Cout), lambda n: (0, 0)),
            pl.BlockSpec((9 * Cout, Cout), lambda n: (0, 0)),
            pl.BlockSpec((1, Cout), lambda n: (0, 0)),
        ],
        out_specs=pl.BlockSpec((Nb, H2 * W2, Cout), lambda n: (n, 0, 0)),
        scratch_shapes=[pltpu.VMEM((Nb, H2 + 2, W2 + 2, Cin), jnp.float32),
                        pltpu.VMEM((Nb, H2 + 2, W2 + 2, Cout), jnp.float32)],
        compiler_params=pltpu.CompilerParams(
            dimension_semantics=("parallel",),           # megacore splits the batch
            vmem_limit_bytes=32 * 1024 * 1024),
        cost_estimate=pl.CostEstimate(flops=flops, transcendentals=0,
                                      bytes_accessed=bytes_accessed),
    )(x6, w1, p["b1"], wA, p["shift1"], wB, p["shift2"])

    out = out.reshape(N, H2, W2, Cout)                   # free, contiguous
    return jnp.transpose(out, (0, 3, 1, 2))              # NHWC -> NCHW boundary


# ------------------------------- Parameter setup ------------------------------

def make_params(key, in_planes, out_planes):
    eps = 1e-5
    ks = jax.random.split(key, 12)

    # conv1X1: PyTorch weight (in_planes, 2*in_planes, 1, 1) + bias
    w1_pt = 0.1 * jax.random.normal(ks[0], (in_planes, 2 * in_planes), jnp.float32)
    b1 = 0.1 * jax.random.normal(ks[1], (1, in_planes), jnp.float32)
    w1_mat = jnp.transpose(w1_pt)                        # (2*Cin, Cin): rows = [max | avg]

    def conv_bn(kw, kg, kb, km, kv, cin, cout):
        w_pt = 0.1 * jax.random.normal(kw, (cout, cin, 3, 3), jnp.float32)
        w_hwio = jnp.transpose(w_pt, (2, 3, 1, 0))       # (3,3,Cin,Cout)
        gamma = 1.0 + 0.1 * jax.random.normal(kg, (cout,), jnp.float32)
        beta = 0.1 * jax.random.normal(kb, (cout,), jnp.float32)
        mean = 0.1 * jax.random.normal(km, (cout,), jnp.float32)
        var = 0.5 + jax.random.uniform(kv, (cout,), jnp.float32)
        scale = gamma / jnp.sqrt(var + eps)
        shift = beta - mean * scale
        return w_hwio, scale.reshape(1, cout), shift.reshape(1, cout)

    wc1, s1, sh1 = conv_bn(ks[2], ks[3], ks[4], ks[5], ks[6], in_planes, out_planes)
    wc2, s2, sh2 = conv_bn(ks[7], ks[8], ks[9], ks[10], ks[11], out_planes, out_planes)

    return {"w1": w1_mat, "b1": b1,
            "wc1": wc1, "scale1": s1, "shift1": sh1,
            "wc2": wc2, "scale2": s2, "shift2": sh2}


# --------------------------------- Reference -----------------------------------

def reference_forward(x_nchw, p):
    x = jnp.transpose(x_nchw, (0, 2, 3, 1))
    mx = lax.reduce_window(x, -jnp.inf, lax.max, (1, 2, 2, 1), (1, 2, 2, 1), "VALID")
    av = lax.reduce_window(x, 0.0, lax.add, (1, 2, 2, 1), (1, 2, 2, 1), "VALID") * 0.25
    mix = jnp.concatenate([mx, av], axis=-1)
    y = jnp.einsum("nhwc,cd->nhwd", mix, p["w1"]) + p["b1"][0]

    def cbr(z, w, s, sh):
        z = lax.conv_general_dilated(z, w, (1, 1), "SAME",
                                     dimension_numbers=("NHWC", "HWIO", "NHWC"))
        return jnp.maximum(z * s[0] + sh[0], 0.0)

    y = cbr(y, p["wc1"], p["scale1"], p["shift1"])
    y = cbr(y, p["wc2"], p["scale2"], p["shift2"])
    return jnp.transpose(y, (0, 3, 1, 2))


# ----------------------------------- Main ---------------------------------------

if __name__ == "__main__":
    key = jax.random.PRNGKey(0)
    k_x, k_p = jax.random.split(key)

    N, C_IN, C_OUT, H, W = 2, 4, 8, 16, 16
    x = jax.random.normal(k_x, (N, C_IN, H, W), jnp.float32)   # NCHW like PyTorch
    params = make_params(k_p, C_IN, C_OUT)

    down = jax.jit(down_forward, static_argnames=("compute_dtype", "images_per_step"))
    ref = jax.block_until_ready(reference_forward(x, params))

    # f32 path (default; exact wrt the reference).
    out = jax.block_until_ready(down(x, params))
    assert out.shape == (N, C_OUT, H // 2, W // 2), out.shape
    assert jnp.allclose(out, ref, atol=1e-4, rtol=1e-4), \
        float(jnp.max(jnp.abs(out - ref)))

    # bf16-MXU path (recommended on v6e/v7x): dots in bf16, accumulation/BN/ReLU in f32.
    out_bf16 = jax.block_until_ready(down(x, params, compute_dtype=jnp.bfloat16))
    assert jnp.allclose(out_bf16, ref, atol=1e-1, rtol=1e-1), \
        float(jnp.max(jnp.abs(out_bf16 - ref)))

    print("KERNEL_OK")
</pallas_src>

<mosaic_0001>
module attributes {stable_mosaic.version = 11 : i64} {
  func.func @_down_fused_kernel(%arg0: i32, %arg1: memref<1x8x2x8x8xf32, #tpu.memory_space<vmem>>, %arg2: memref<12x4xf32, #tpu.memory_space<vmem>>, %arg3: memref<1x4xf32, #tpu.memory_space<vmem>>, %arg4: memref<36x8xf32, #tpu.memory_space<vmem>>, %arg5: memref<1x8xf32, #tpu.memory_space<vmem>>, %arg6: memref<72x8xf32, #tpu.memory_space<vmem>>, %arg7: memref<1x8xf32, #tpu.memory_space<vmem>>, %arg8: memref<1x64x8xf32, #tpu.memory_space<vmem>>, %arg9: memref<1x10x10x4xf32, #tpu.memory_space<vmem>>, %arg10: memref<1x10x10x8xf32, #tpu.memory_space<vmem>>) attributes {dimension_semantics = [#tpu.dimension_semantics<parallel>], iteration_bounds = array<i64: 2>, scalar_prefetch = 0 : i64, scratch_operands = 2 : i64, tpu.core_type = #tpu.core_type<tc>, window_params = [{transform_indices = @transform_0, window_bounds = array<i64: 1, 8, 2, 8, 8>}, {pipeline_mode = #tpu.pipeline_mode<synchronous>, transform_indices = @transform_1, window_bounds = array<i64: 12, 4>}, {pipeline_mode = #tpu.pipeline_mode<synchronous>, transform_indices = @transform_2, window_bounds = array<i64: 1, 4>}, {pipeline_mode = #tpu.pipeline_mode<synchronous>, transform_indices = @transform_3, window_bounds = array<i64: 36, 8>}, {pipeline_mode = #tpu.pipeline_mode<synchronous>, transform_indices = @transform_4, window_bounds = array<i64: 1, 8>}, {pipeline_mode = #tpu.pipeline_mode<synchronous>, transform_indices = @transform_5, window_bounds = array<i64: 72, 8>}, {pipeline_mode = #tpu.pipeline_mode<synchronous>, transform_indices = @transform_6, window_bounds = array<i64: 1, 8>}, {transform_indices = @transform_7, window_bounds = array<i64: 1, 64, 8>}]} {
    %c0 = arith.constant 0 : index
    %c0_0 = arith.constant 0 : index
    %c0_1 = arith.constant 0 : index
    %c0_2 = arith.constant 0 : index
    %c0_3 = arith.constant 0 : index
    %0 = vector.load %arg1[%c0, %c0_0, %c0_1, %c0_2, %c0_3] : memref<1x8x2x8x8xf32, #tpu.memory_space<vmem>>, vector<1x8x2x8x8xf32>
    %1 = vector.extract_strided_slice %0 {offsets = [0, 0, 0, 0, 0], sizes = [1, 8, 1, 8, 8], strides = [1, 1, 1, 1, 1]} : vector<1x8x2x8x8xf32> to vector<1x8x1x8x8xf32>
    %2 = vector.shape_cast %1 : vector<1x8x1x8x8xf32> to vector<1x8x8x8xf32>
    %3 = vector.extract_strided_slice %0 {offsets = [0, 0, 1, 0, 0], sizes = [1, 8, 1, 8, 8], strides = [1, 1, 1, 1, 1]} : vector<1x8x2x8x8xf32> to vector<1x8x1x8x8xf32>
    %4 = vector.shape_cast %3 : vector<1x8x1x8x8xf32> to vector<1x8x8x8xf32>
    %5 = arith.maximumf %2, %4 : vector<1x8x8x8xf32>
    %6 = vector.extract_strided_slice %5 {offsets = [0, 0, 0, 0], sizes = [1, 8, 8, 4], strides = [1, 1, 1, 1]} : vector<1x8x8x8xf32> to vector<1x8x8x4xf32>
    %7 = vector.extract_strided_slice %5 {offsets = [0, 0, 0, 4], sizes = [1, 8, 8, 4], strides = [1, 1, 1, 1]} : vector<1x8x8x8xf32> to vector<1x8x8x4xf32>
    %8 = arith.maximumf %6, %7 : vector<1x8x8x4xf32>
    %9 = arith.addf %2, %4 : vector<1x8x8x8xf32>
    %10 = tpu.concatenate %8, %9 in 3 : vector<1x8x8x4xf32>, vector<1x8x8x8xf32> -> vector<1x8x8x12xf32>
    %11 = vector.shape_cast %10 : vector<1x8x8x12xf32> to vector<64x12xf32>
    %c0_4 = arith.constant 0 : index
    %c0_5 = arith.constant 0 : index
    %12 = vector.load %arg2[%c0_4, %c0_5] : memref<12x4xf32, #tpu.memory_space<vmem>>, vector<12x4xf32>
    %cst = arith.constant dense<0.000000e+00> : vector<64x4xf32>
    %13 = tpu.matmul %11, %12, %cst {dimension_numbers = #tpu.dot_dimension_numbers<[1], [0], [0], [1], [0, 0, 1, 1], [], []>} : vector<64x12xf32>, vector<12x4xf32>, vector<64x4xf32> -> vector<64x4xf32>
    %c0_6 = arith.constant 0 : index
    %c0_7 = arith.constant 0 : index
    %14 = vector.load %arg3[%c0_6, %c0_7] : memref<1x4xf32, #tpu.memory_space<vmem>>, vector<1x4xf32>
    %15 = vector.broadcast %14 : vector<1x4xf32> to vector<64x4xf32>
    %16 = arith.addf %13, %15 : vector<64x4xf32>
    %17 = vector.shape_cast %16 : vector<64x4xf32> to vector<1x8x8x4xf32>
    %cst_8 = arith.constant 0.000000e+00 : f32
    %18 = vector.broadcast %cst_8 : f32 to vector<1x1x10x4xf32>
    %c0_9 = arith.constant 0 : index
    %c0_10 = arith.constant 0 : index
    %c0_11 = arith.constant 0 : index
    %c0_12 = arith.constant 0 : index
    %19 = vector.load %arg9[%c0_9, %c0_10, %c0_11, %c0_12] : memref<1x10x10x4xf32, #tpu.memory_space<vmem>>, vector<1x1x10x4xf32>
    tpu.vector_store %arg9[%c0_9, %c0_10, %c0_11, %c0_12], %18 {strides = array<i32>} : memref<1x10x10x4xf32, #tpu.memory_space<vmem>>, vector<1x1x10x4xf32>,
    %c0_13 = arith.constant 0 : index
    %c9 = arith.constant 9 : index
    %c0_14 = arith.constant 0 : index
    %c0_15 = arith.constant 0 : index
    %20 = vector.load %arg9[%c0_13, %c9, %c0_14, %c0_15] : memref<1x10x10x4xf32, #tpu.memory_space<vmem>>, vector<1x1x10x4xf32>
    tpu.vector_store %arg9[%c0_13, %c9, %c0_14, %c0_15], %18 {strides = array<i32>} : memref<1x10x10x4xf32, #tpu.memory_space<vmem>>, vector<1x1x10x4xf32>,
    %cst_16 = arith.constant 0.000000e+00 : f32
    %21 = vector.broadcast %cst_16 : f32 to vector<1x8x1x4xf32>
    %c0_17 = arith.constant 0 : index
    %c1 = arith.constant 1 : index
    %c0_18 = arith.constant 0 : index
    %c0_19 = arith.constant 0 : index
    %22 = vector.load %arg9[%c0_17, %c1, %c0_18, %c0_19] : memref<1x10x10x4xf32, #tpu.memory_space<vmem>>, vector<1x8x1x4xf32>
    tpu.vector_store %arg9[%c0_17, %c1, %c0_18, %c0_19], %21 {strides = array<i32>} : memref<1x10x10x4xf32, #tpu.memory_space<vmem>>, vector<1x8x1x4xf32>,
    %c0_20 = arith.constant 0 : index
    %c1_21 = arith.constant 1 : index
    %c9_22 = arith.constant 9 : index
    %c0_23 = arith.constant 0 : index
    %23 = vector.load %arg9[%c0_20, %c1_21, %c9_22, %c0_23] : memref<1x10x10x4xf32, #tpu.memory_space<vmem>>, vector<1x8x1x4xf32>
    tpu.vector_store %arg9[%c0_20, %c1_21, %c9_22, %c0_23], %21 {strides = array<i32>} : memref<1x10x10x4xf32, #tpu.memory_space<vmem>>, vector<1x8x1x4xf32>,
    %c0_24 = arith.constant 0 : index
    %c1_25 = arith.constant 1 : index
    %c1_26 = arith.constant 1 : index
    %c0_27 = arith.constant 0 : index
    %24 = vector.load %arg9[%c0_24, %c1_25, %c1_26, %c0_27] : memref<1x10x10x4xf32, #tpu.memory_space<vmem>>, vector<1x8x8x4xf32>
    tpu.vector_store %arg9[%c0_24, %c1_25, %c1_26, %c0_27], %17 {strides = array<i32>} : memref<1x10x10x4xf32, #tpu.memory_space<vmem>>, vector<1x8x8x4xf32>,
    %c0_28 = arith.constant 0 : index
    %c0_29 = arith.constant 0 : index
    %c0_30 = arith.constant 0 : index
    %c0_31 = arith.constant 0 : index
    %25 = vector.load %arg9[%c0_28, %c0_29, %c0_30, %c0_31] : memref<1x10x10x4xf32, #tpu.memory_space<vmem>>, vector<1x8x8x4xf32>
    %c0_32 = arith.constant 0 : index
    %c0_33 = arith.constant 0 : index
    %c1_34 = arith.constant 1 : index
    %c0_35 = arith.constant 0 : index
    %26 = vector.load %arg9[%c0_32, %c0_33, %c1_34, %c0_35] : memref<1x10x10x4xf32, #tpu.memory_space<vmem>>, vector<1x8x8x4xf32>
    %c0_36 = arith.constant 0 : index
    %c0_37 = arith.constant 0 : index
    %c2 = arith.constant 2 : index
    %c0_38 = arith.constant 0 : index
    %27 = vector.load %arg9[%c0_36, %c0_37, %c2, %c0_38] : memref<1x10x10x4xf32, #tpu.memory_space<vmem>>, vector<1x8x8x4xf32>
    %c0_39 = arith.constant 0 : index
    %c1_40 = arith.constant 1 : index
    %c0_41 = arith.constant 0 : index
    %c0_42 = arith.constant 0 : index
    %28 = vector.load %arg9[%c0_39, %c1_40, %c0_41, %c0_42] : memref<1x10x10x4xf32, #tpu.memory_space<vmem>>, vector<1x8x8x4xf32>
    %c0_43 = arith.constant 0 : index
    %c1_44 = arith.constant 1 : index
    %c1_45 = arith.constant 1 : index
    %c0_46 = arith.constant 0 : index
    %29 = vector.load %arg9[%c0_43, %c1_44, %c1_45, %c0_46] : memref<1x10x10x4xf32, #tpu.memory_space<vmem>>, vector<1x8x8x4xf32>
    %c0_47 = arith.constant 0 : index
    %c1_48 = arith.constant 1 : index
    %c2_49 = arith.constant 2 : index
    %c0_50 = arith.constant 0 : index
    %30 = vector.load %arg9[%c0_47, %c1_48, %c2_49, %c0_50] : memref<1x10x10x4xf32, #tpu.memory_space<vmem>>, vector<1x8x8x4xf32>
    %c0_51 = arith.constant 0 : index
    %c2_52 = arith.constant 2 : index
    %c0_53 = arith.constant 0 : index
    %c0_54 = arith.constant 0 : index
    %31 = vector.load %arg9[%c0_51, %c2_52, %c0_53, %c0_54] : memref<1x10x10x4xf32, #tpu.memory_space<vmem>>, vector<1x8x8x4xf32>
    %c0_55 = arith.constant 0 : index
    %c2_56 = arith.constant 2 : index
    %c1_57 = arith.constant 1 : index
    %c0_58 = arith.constant 0 : index
    %32 = vector.load %arg9[%c0_55, %c2_56, %c1_57, %c0_58] : memref<1x10x10x4xf32, #tpu.memory_space<vmem>>, vector<1x8x8x4xf32>
    %c0_59 = arith.constant 0 : index
    %c2_60 = arith.constant 2 : index
    %c2_61 = arith.constant 2 : index
    %c0_62 = arith.constant 0 : index
    %33 = vector.load %arg9[%c0_59, %c2_60, %c2_61, %c0_62] : memref<1x10x10x4xf32, #tpu.memory_space<vmem>>, vector<1x8x8x4xf32>
    %34 = tpu.concatenate %25, %26, %27, %28, %29, %30, %31, %32, %33 in 3 : vector<1x8x8x4xf32>, vector<1x8x8x4xf32>, vector<1x8x8x4xf32>, vector<1x8x8x4xf32>, vector<1x8x8x4xf32>, vector<1x8x8x4xf32>, vector<1x8x8x4xf32>, vector<1x8x8x4xf32>, vector<1x8x8x4xf32> -> vector<1x8x8x36xf32>
    %35 = vector.shape_cast %34 : vector<1x8x8x36xf32> to vector<64x36xf32>
    %c0_63 = arith.constant 0 : index
    %c0_64 = arith.constant 0 : index
    %36 = vector.load %arg4[%c0_63, %c0_64] : memref<36x8xf32, #tpu.memory_space<vmem>>, vector<36x8xf32>
    %cst_65 = arith.constant dense<0.000000e+00> : vector<64x8xf32>
    %37 = tpu.matmul %35, %36, %cst_65 {dimension_numbers = #tpu.dot_dimension_numbers<[1], [0], [0], [1], [0, 0, 1, 1], [], []>} : vector<64x36xf32>, vector<36x8xf32>, vector<64x8xf32> -> vector<64x8xf32>
    %c0_66 = arith.constant 0 : index
    %c0_67 = arith.constant 0 : index
    %38 = vector.load %arg5[%c0_66, %c0_67] : memref<1x8xf32, #tpu.memory_space<vmem>>, vector<1x8xf32>
    %39 = vector.broadcast %38 : vector<1x8xf32> to vector<64x8xf32>
    %40 = arith.addf %37, %39 : vector<64x8xf32>
    %cst_68 = arith.constant 0.000000e+00 : f32
    %41 = vector.broadcast %cst_68 : f32 to vector<64x8xf32>
    %42 = arith.maximumf %40, %41 : vector<64x8xf32>
    %43 = vector.shape_cast %42 : vector<64x8xf32> to vector<1x8x8x8xf32>
    %cst_69 = arith.constant 0.000000e+00 : f32
    %44 = vector.broadcast %cst_69 : f32 to vector<1x1x10x8xf32>
    %c0_70 = arith.constant 0 : index
    %c0_71 = arith.constant 0 : index
    %c0_72 = arith.constant 0 : index
    %c0_73 = arith.constant 0 : index
    %45 = vector.load %arg10[%c0_70, %c0_71, %c0_72, %c0_73] : memref<1x10x10x8xf32, #tpu.memory_space<vmem>>, vector<1x1x10x8xf32>
    tpu.vector_store %arg10[%c0_70, %c0_71, %c0_72, %c0_73], %44 {strides = array<i32>} : memref<1x10x10x8xf32, #tpu.memory_space<vmem>>, vector<1x1x10x8xf32>,
    %c0_74 = arith.constant 0 : index
    %c9_75 = arith.constant 9 : index
    %c0_76 = arith.constant 0 : index
    %c0_77 = arith.constant 0 : index
    %46 = vector.load %arg10[%c0_74, %c9_75, %c0_76, %c0_77] : memref<1x10x10x8xf32, #tpu.memory_space<vmem>>, vector<1x1x10x8xf32>
    tpu.vector_store %arg10[%c0_74, %c9_75, %c0_76, %c0_77], %44 {strides = array<i32>} : memref<1x10x10x8xf32, #tpu.memory_space<vmem>>, vector<1x1x10x8xf32>,
    %cst_78 = arith.constant 0.000000e+00 : f32
    %47 = vector.broadcast %cst_78 : f32 to vector<1x8x1x8xf32>
    %c0_79 = arith.constant 0 : index
    %c1_80 = arith.constant 1 : index
    %c0_81 = arith.constant 0 : index
    %c0_82 = arith.constant 0 : index
    %48 = vector.load %arg10[%c0_79, %c1_80, %c0_81, %c0_82] : memref<1x10x10x8xf32, #tpu.memory_space<vmem>>, vector<1x8x1x8xf32>
    tpu.vector_store %arg10[%c0_79, %c1_80, %c0_81, %c0_82], %47 {strides = array<i32>} : memref<1x10x10x8xf32, #tpu.memory_space<vmem>>, vector<1x8x1x8xf32>,
    %c0_83 = arith.constant 0 : index
    %c1_84 = arith.constant 1 : index
    %c9_85 = arith.constant 9 : index
    %c0_86 = arith.constant 0 : index
    %49 = vector.load %arg10[%c0_83, %c1_84, %c9_85, %c0_86] : memref<1x10x10x8xf32, #tpu.memory_space<vmem>>, vector<1x8x1x8xf32>
    tpu.vector_store %arg10[%c0_83, %c1_84, %c9_85, %c0_86], %47 {strides = array<i32>} : memref<1x10x10x8xf32, #tpu.memory_space<vmem>>, vector<1x8x1x8xf32>,
    %c0_87 = arith.constant 0 : index
    %c1_88 = arith.constant 1 : index
    %c1_89 = arith.constant 1 : index
    %c0_90 = arith.constant 0 : index
    %50 = vector.load %arg10[%c0_87, %c1_88, %c1_89, %c0_90] : memref<1x10x10x8xf32, #tpu.memory_space<vmem>>, vector<1x8x8x8xf32>
    tpu.vector_store %arg10[%c0_87, %c1_88, %c1_89, %c0_90], %43 {strides = array<i32>} : memref<1x10x10x8xf32, #tpu.memory_space<vmem>>, vector<1x8x8x8xf32>,
    %c0_91 = arith.constant 0 : index
    %c0_92 = arith.constant 0 : index
    %c0_93 = arith.constant 0 : index
    %c0_94 = arith.constant 0 : index
    %51 = vector.load %arg10[%c0_91, %c0_92, %c0_93, %c0_94] : memref<1x10x10x8xf32, #tpu.memory_space<vmem>>, vector<1x8x8x8xf32>
    %c0_95 = arith.constant 0 : index
    %c0_96 = arith.constant 0 : index
    %c1_97 = arith.constant 1 : index
    %c0_98 = arith.constant 0 : index
    %52 = vector.load %arg10[%c0_95, %c0_96, %c1_97, %c0_98] : memref<1x10x10x8xf32, #tpu.memory_space<vmem>>, vector<1x8x8x8xf32>
    %c0_99 = arith.constant 0 : index
    %c0_100 = arith.constant 0 : index
    %c2_101 = arith.constant 2 : index
    %c0_102 = arith.constant 0 : index
    %53 = vector.load %arg10[%c0_99, %c0_100, %c2_101, %c0_102] : memref<1x10x10x8xf32, #tpu.memory_space<vmem>>, vector<1x8x8x8xf32>
    %c0_103 = arith.constant 0 : index
    %c1_104 = arith.constant 1 : index
    %c0_105 = arith.constant 0 : index
    %c0_106 = arith.constant 0 : index
    %54 = vector.load %arg10[%c0_103, %c1_104, %c0_105, %c0_106] : memref<1x10x10x8xf32, #tpu.memory_space<vmem>>, vector<1x8x8x8xf32>
    %c0_107 = arith.constant 0 : index
    %c1_108 = arith.constant 1 : index
    %c1_109 = arith.constant 1 : index
    %c0_110 = arith.constant 0 : index
    %55 = vector.load %arg10[%c0_107, %c1_108, %c1_109, %c0_110] : memref<1x10x10x8xf32, #tpu.memory_space<vmem>>, vector<1x8x8x8xf32>
    %c0_111 = arith.constant 0 : index
    %c1_112 = arith.constant 1 : index
    %c2_113 = arith.constant 2 : index
    %c0_114 = arith.constant 0 : index
    %56 = vector.load %arg10[%c0_111, %c1_112, %c2_113, %c0_114] : memref<1x10x10x8xf32, #tpu.memory_space<vmem>>, vector<1x8x8x8xf32>
    %c0_115 = arith.constant 0 : index
    %c2_116 = arith.constant 2 : index
    %c0_117 = arith.constant 0 : index
    %c0_118 = arith.constant 0 : index
    %57 = vector.load %arg10[%c0_115, %c2_116, %c0_117, %c0_118] : memref<1x10x10x8xf32, #tpu.memory_space<vmem>>, vector<1x8x8x8xf32>
    %c0_119 = arith.constant 0 : index
    %c2_120 = arith.constant 2 : index
    %c1_121 = arith.constant 1 : index
    %c0_122 = arith.constant 0 : index
    %58 = vector.load %arg10[%c0_119, %c2_120, %c1_121, %c0_122] : memref<1x10x10x8xf32, #tpu.memory_space<vmem>>, vector<1x8x8x8xf32>
    %c0_123 = arith.constant 0 : index
    %c2_124 = arith.constant 2 : index
    %c2_125 = arith.constant 2 : index
    %c0_126 = arith.constant 0 : index
    %59 = vector.load %arg10[%c0_123, %c2_124, %c2_125, %c0_126] : memref<1x10x10x8xf32, #tpu.memory_space<vmem>>, vector<1x8x8x8xf32>
    %60 = tpu.concatenate %51, %52, %53, %54, %55, %56, %57, %58, %59 in 3 : vector<1x8x8x8xf32>, vector<1x8x8x8xf32>, vector<1x8x8x8xf32>, vector<1x8x8x8xf32>, vector<1x8x8x8xf32>, vector<1x8x8x8xf32>, vector<1x8x8x8xf32>, vector<1x8x8x8xf32>, vector<1x8x8x8xf32> -> vector<1x8x8x72xf32>
    %61 = vector.shape_cast %60 : vector<1x8x8x72xf32> to vector<64x72xf32>
    %c0_127 = arith.constant 0 : index
    %c0_128 = arith.constant 0 : index
    %62 = vector.load %arg6[%c0_127, %c0_128] : memref<72x8xf32, #tpu.memory_space<vmem>>, vector<72x8xf32>
    %cst_129 = arith.constant dense<0.000000e+00> : vector<64x8xf32>
    %63 = tpu.matmul %61, %62, %cst_129 {dimension_numbers = #tpu.dot_dimension_numbers<[1], [0], [0], [1], [0, 0, 1, 1], [], []>} : vector<64x72xf32>, vector<72x8xf32>, vector<64x8xf32> -> vector<64x8xf32>
    %c0_130 = arith.constant 0 : index
    %c0_131 = arith.constant 0 : index
    %64 = vector.load %arg7[%c0_130, %c0_131] : memref<1x8xf32, #tpu.memory_space<vmem>>, vector<1x8xf32>
    %65 = vector.broadcast %64 : vector<1x8xf32> to vector<64x8xf32>
    %66 = arith.addf %63, %65 : vector<64x8xf32>
    %cst_132 = arith.constant 0.000000e+00 : f32
    %67 = vector.broadcast %cst_132 : f32 to vector<64x8xf32>
    %68 = arith.maximumf %66, %67 : vector<64x8xf32>
    %69 = vector.shape_cast %68 : vector<64x8xf32> to vector<1x64x8xf32>
    %c0_133 = arith.constant 0 : index
    %c0_134 = arith.constant 0 : index
    %c0_135 = arith.constant 0 : index
    %70 = vector.load %arg8[%c0_133, %c0_134, %c0_135] : memref<1x64x8xf32, #tpu.memory_space<vmem>>, vector<1x64x8xf32>
    tpu.vector_store %arg8[%c0_133, %c0_134, %c0_135], %69 {strides = array<i32>} : memref<1x64x8xf32, #tpu.memory_space<vmem>>, vector<1x64x8xf32>,
    return
  }
  func.func @transform_0(%arg0: i32) -> (i32, i32, i32, i32, i32) {
    %c0_i32 = arith.constant 0 : i32
    %c0_i32_0 = arith.constant 0 : i32
    %c0_i32_1 = arith.constant 0 : i32
    %c0_i32_2 = arith.constant 0 : i32
    %c0_i32_3 = arith.constant 0 : i32
    return %arg0, %c0_i32, %c0_i32_0, %c0_i32_1, %c0_i32_2 : i32, i32, i32, i32, i32
  }
  func.func @transform_1(%arg0: i32) -> (i32, i32) {
    %c0_i32 = arith.constant 0 : i32
    %c0_i32_0 = arith.constant 0 : i32
    %c0_i32_1 = arith.constant 0 : i32
    return %c0_i32, %c0_i32_0 : i32, i32
  }
  func.func @transform_2(%arg0: i32) -> (i32, i32) {
    %c0_i32 = arith.constant 0 : i32
    %c0_i32_0 = arith.constant 0 : i32
    %c0_i32_1 = arith.constant 0 : i32
    return %c0_i32, %c0_i32_0 : i32, i32
  }
  func.func @transform_3(%arg0: i32) -> (i32, i32) {
    %c0_i32 = arith.constant 0 : i32
    %c0_i32_0 = arith.constant 0 : i32
    %c0_i32_1 = arith.constant 0 : i32
    return %c0_i32, %c0_i32_0 : i32, i32
  }
  func.func @transform_4(%arg0: i32) -> (i32, i32) {
    %c0_i32 = arith.constant 0 : i32
    %c0_i32_0 = arith.constant 0 : i32
    %c0_i32_1 = arith.constant 0 : i32
    return %c0_i32, %c0_i32_0 : i32, i32
  }
  func.func @transform_5(%arg0: i32) -> (i32, i32) {
    %c0_i32 = arith.constant 0 : i32
    %c0_i32_0 = arith.constant 0 : i32
    %c0_i32_1 = arith.constant 0 : i32
    return %c0_i32, %c0_i32_0 : i32, i32
  }
  func.func @transform_6(%arg0: i32) -> (i32, i32) {
    %c0_i32 = arith.constant 0 : i32
    %c0_i32_0 = arith.constant 0 : i32
    %c0_i32_1 = arith.constant 0 : i32
    return %c0_i32, %c0_i32_0 : i32, i32
  }
  func.func @transform_7(%arg0: i32) -> (i32, i32, i32) {
    %c0_i32 = arith.constant 0 : i32
    %c0_i32_0 = arith.constant 0 : i32
    %c0_i32_1 = arith.constant 0 : i32
    return %arg0, %c0_i32, %c0_i32_0 : i32, i32, i32
  }
}

</mosaic_0001>

<llo_original>
// kernel: down_forward.1
$region0: #{down_forward.1}
  #allocation0 [shape = 'u32[]', space=smem, size = 0x4, offset = 0x4, fixed_abs, tag = 'smem constant byte address 0x4 - core index']
  #allocation1 [shape = 'u32[144,128]{1,0:T(1,128)}', space=vmem, size = 0x12000, scoped, tag = 'internal scratch']
  #allocation2 [shape = 'f32[1,10,10,4]{3,2,1,0:T(8,128)}', space=vmem, size = 0x14000, scoped, tag = 'scratch operand']
  #allocation3 [shape = 'f32[1,10,10,8]{3,2,1,0:T(8,128)}', space=vmem, size = 0x14000, scoped, tag = 'scratch operand']
  %s0 = inlined_call_operand.vmem [shape: f32[2,8,2,8,8], index: 0, kind: input, shape index: {}]
  %s1 = inlined_call_operand.vmem [shape: f32[12,4], index: 1, kind: input, shape index: {}]
  %s2 = inlined_call_operand.vmem [shape: f32[1,4], index: 2, kind: input, shape index: {}]
  %s3 = inlined_call_operand.vmem [shape: f32[36,8], index: 3, kind: input, shape index: {}]
  %s4 = inlined_call_operand.vmem [shape: f32[1,8], index: 4, kind: input, shape index: {}]
  %s5 = inlined_call_operand.vmem [shape: f32[72,8], index: 5, kind: input, shape index: {}]
  %s6 = inlined_call_operand.vmem [shape: f32[1,8], index: 6, kind: input, shape index: {}]
  %s7 = inlined_call_operand.vmem [shape: f32[2,64,8], index: 7, kind: output, shape index: {}]
  %s8 = sld [smem:[#allocation0]]
  $region61: #{down_forward.1} parent=0
    _
  %s10 = ssub.s32 1, %s8
  %s11 = scalar_select 0, %s10, %s8
  loop: start=0, step=1, limit=4
  $region2: #{down_forward.1} parent=0 // loop_pre_header
    _
  $region3: #{down_forward.1} parent=0 // loop_header
    %s13 = sphi 0, %s17
    %p14 = scmp.ge.s32.totalorder %s13, 4
    %s23 = sphi 0, %s25
    %s26 = sphi 0, %s23
    %s27 = sphi 0, %s26
    %s43 = sphi 0, %s27
    %s47 = sphi 0, %s47
    %s49 = sphi 0, %s47
    %s50 = sphi 0, %s49
    %s64 = sphi 0, %s50
    %s68 = sphi 0, %s68
    %s70 = sphi 0, %s68
    %s71 = sphi 0, %s70
    %s85 = sphi 0, %s71
    %s89 = sphi 0, %s89
    %s91 = sphi 0, %s89
    %s92 = sphi 0, %s91
    %s106 = sphi 0, %s92
    %s110 = sphi 0, %s110
    %s112 = sphi 0, %s110
    %s113 = sphi 0, %s112
    %s127 = sphi 0, %s113
    %s131 = sphi 0, %s131
    %s133 = sphi 0, %s131
    %s134 = sphi 0, %s133
    %s148 = sphi 0, %s134
    %s152 = sphi 0, %s152
    %s154 = sphi 0, %s152
    %s155 = sphi 0, %s154
    %s169 = sphi 0, %s155
    %s175 = sphi 0, %s177
    %s178 = sphi 0, %s175
    %s179 = sphi 0, %s178
    %s195 = sphi 0, %s179
  $region4: #{down_forward.1} parent=0 // loop_header_branch
    %16 = sbr.rel (%p14) target = $region8
  $region5: #{down_forward.1} parent=0 // loop_body
    %s18 = ssub.s32 %s13, 1
    %s19 = ssub.s32 %s13, 2
    %s20 = sadd.s32 %s13, 1
    %s21 = ssub.s32 %s13, %s20
    %p22 = scmp.eq.s32.totalorder %s21, 0
    %s24 = sadd.s32 %s23, 1
    %s25 = scalar_select %p22, %s23, %s24
    %p28 = pneg %p22
    %p29 = scmp.eq.s32.totalorder %s13, 1
    %p30 = por %p28, %p29
    %p31 = scmp.ne.s32.totalorder %s23, %s26
    %p32 = scmp.eq.s32.totalorder %s13, 0
    %p33 = por %p31, %p32
    %p34 = scmp.ne.s32.totalorder %s23, %s26
    %p35 = scmp.eq.s32.totalorder %s18, 1
    %p36 = por %p34, %p35
    %p37 = scmp.ne.s32.totalorder %s26, %s27
    %p38 = scmp.eq.s32.totalorder %s18, 0
    %p39 = por %p37, %p38
    %p40 = scmp.ne.s32.totalorder %s26, %s27
    %p41 = scmp.eq.s32.totalorder %s19, 1
    %p42 = por %p40, %p41
    %p44 = scmp.ne.s32.totalorder %s27, %s43
    %p45 = scmp.eq.s32.totalorder %s19, 0
    %p46 = por %p44, %p45
    %s48 = sadd.s32 %s47, 1
    %p51 = scmp.eq.s32.totalorder %s13, 1
    %p52 = scmp.ne.s32.totalorder %s47, %s49
    %p53 = scmp.eq.s32.totalorder %s13, 0
    %p54 = por %p52, %p53
    %p55 = scmp.ne.s32.totalorder %s47, %s49
    %p56 = scmp.eq.s32.totalorder %s18, 1
    %p57 = por %p55, %p56
    %p58 = scmp.ne.s32.totalorder %s49, %s50
    %p59 = scmp.eq.s32.totalorder %s18, 0
    %p60 = por %p58, %p59
    %p61 = scmp.ne.s32.totalorder %s49, %s50
    %p62 = scmp.eq.s32.totalorder %s19, 1
    %p63 = por %p61, %p62
    %p65 = scmp.ne.s32.totalorder %s50, %s64
    %p66 = scmp.eq.s32.totalorder %s19, 0
    %p67 = por %p65, %p66
    %s69 = sadd.s32 %s68, 1
    %p72 = scmp.eq.s32.totalorder %s13, 1
    %p73 = scmp.ne.s32.totalorder %s68, %s70
    %p74 = scmp.eq.s32.totalorder %s13, 0
    %p75 = por %p73, %p74
    %p76 = scmp.ne.s32.totalorder %s68, %s70
    %p77 = scmp.eq.s32.totalorder %s18, 1
    %p78 = por %p76, %p77
    %p79 = scmp.ne.s32.totalorder %s70, %s71
    %p80 = scmp.eq.s32.totalorder %s18, 0
    %p81 = por %p79, %p80
    %p82 = scmp.ne.s32.totalorder %s70, %s71
    %p83 = scmp.eq.s32.totalorder %s19, 1
    %p84 = por %p82, %p83
    %p86 = scmp.ne.s32.totalorder %s71, %s85
    %p87 = scmp.eq.s32.totalorder %s19, 0
    %p88 = por %p86, %p87
    %s90 = sadd.s32 %s89, 1
    %p93 = scmp.eq.s32.totalorder %s13, 1
    %p94 = scmp.ne.s32.totalorder %s89, %s91
    %p95 = scmp.eq.s32.totalorder %s13, 0
    %p96 = por %p94, %p95
    %p97 = scmp.ne.s32.totalorder %s89, %s91
    %p98 = scmp.eq.s32.totalorder %s18, 1
    %p99 = por %p97, %p98
    %p100 = scmp.ne.s32.totalorder %s91, %s92
    %p101 = scmp.eq.s32.totalorder %s18, 0
    %p102 = por %p100, %p101
    %p103 = scmp.ne.s32.totalorder %s91, %s92
    %p104 = scmp.eq.s32.totalorder %s19, 1
    %p105 = por %p103, %p104
    %p107 = scmp.ne.s32.totalorder %s92, %s106
    %p108 = scmp.eq.s32.totalorder %s19, 0
    %p109 = por %p107, %p108
    %s111 = sadd.s32 %s110, 1
    %p114 = scmp.eq.s32.totalorder %s13, 1
    %p115 = scmp.ne.s32.totalorder %s110, %s112
    %p116 = scmp.eq.s32.totalorder %s13, 0
    %p117 = por %p115, %p116
    %p118 = scmp.ne.s32.totalorder %s110, %s112
    %p119 = scmp.eq.s32.totalorder %s18, 1
    %p120 = por %p118, %p119
    %p121 = scmp.ne.s32.totalorder %s112, %s113
    %p122 = scmp.eq.s32.totalorder %s18, 0
    %p123 = por %p121, %p122
    %p124 = scmp.ne.s32.totalorder %s112, %s113
    %p125 = scmp.eq.s32.totalorder %s19, 1
    %p126 = por %p124, %p125
    %p128 = scmp.ne.s32.totalorder %s113, %s127
    %p129 = scmp.eq.s32.totalorder %s19, 0
    %p130 = por %p128, %p129
    %s132 = sadd.s32 %s131, 1
    %p135 = scmp.eq.s32.totalorder %s13, 1
    %p136 = scmp.ne.s32.totalorder %s131, %s133
    %p137 = scmp.eq.s32.totalorder %s13, 0
    %p138 = por %p136, %p137
    %p139 = scmp.ne.s32.totalorder %s131, %s133
    %p140 = scmp.eq.s32.totalorder %s18, 1
    %p141 = por %p139, %p140
    %p142 = scmp.ne.s32.totalorder %s133, %s134
    %p143 = scmp.eq.s32.totalorder %s18, 0
    %p144 = por %p142, %p143
    %p145 = scmp.ne.s32.totalorder %s133, %s134
    %p146 = scmp.eq.s32.totalorder %s19, 1
    %p147 = por %p145, %p146
    %p149 = scmp.ne.s32.totalorder %s134, %s148
    %p150 = scmp.eq.s32.totalorder %s19, 0
    %p151 = por %p149, %p150
    %s153 = sadd.s32 %s152, 1
    %p156 = scmp.eq.s32.totalorder %s13, 1
    %p157 = scmp.ne.s32.totalorder %s152, %s154
    %p158 = scmp.eq.s32.totalorder %s13, 0
    %p159 = por %p157, %p158
    %p160 = scmp.ne.s32.totalorder %s152, %s154
    %p161 = scmp.eq.s32.totalorder %s18, 1
    %p162 = por %p160, %p161
    %p163 = scmp.ne.s32.totalorder %s154, %s155
    %p164 = scmp.eq.s32.totalorder %s18, 0
    %p165 = por %p163, %p164
    %p166 = scmp.ne.s32.totalorder %s154, %s155
    %p167 = scmp.eq.s32.totalorder %s19, 1
    %p168 = por %p166, %p167
    %p170 = scmp.ne.s32.totalorder %s155, %s169
    %p171 = scmp.eq.s32.totalorder %s19, 0
    %p172 = por %p170, %p171
    %s173 = ssub.s32 %s13, %s20
    %p174 = scmp.eq.s32.totalorder %s173, 0
    %s176 = sadd.s32 %s175, 1
    %s177 = scalar_select %p174, %s175, %s176
    %p180 = pneg %p174
    %p181 = scmp.eq.s32.totalorder %s13, 1
    %p182 = por %p180, %p181
    %p183 = scmp.ne.s32.totalorder %s175, %s178
    %p184 = scmp.eq.s32.totalorder %s13, 0
    %p185 = por %p183, %p184
    %p186 = scmp.ne.s32.totalorder %s175, %s178
    %p187 = scmp.eq.s32.totalorder %s18, 1
    %p188 = por %p186, %p187
    %p189 = scmp.ne.s32.totalorder %s178, %s179
    %p190 = scmp.eq.s32.totalorder %s18, 0
    %p191 = por %p189, %p190
    %p192 = scmp.ne.s32.totalorder %s178, %s179
    %p193 = scmp.eq.s32.totalorder %s19, 1
    %p194 = por %p192, %p193
    %p196 = scmp.ne.s32.totalorder %s179, %s195
    %p197 = scmp.eq.s32.totalorder %s19, 0
    %p198 = por %p196, %p197
    %p199 = scmp.le.s32.totalorder 1, %s13
    %p200 = scmp.lt.s32.totalorder %s13, 3
    %p201 = pnand %p199, %p200
    %p202 = pneg %p201
    // Predicated region
    $region9: #{down_forward.1} parent=5 // pred_check
      _
    $region10: #{down_forward.1} parent=5 // pred_check_branch
      %204 = sbr.rel (%p201) target = $region12
    $region11: #{down_forward.1} parent=5 // pred_region
      %s205 = ssub.s32 %s13, 1
      // Predicated region
      $region13: #{down_forward.1} parent=11 // pred_check
        %p206 = pneg %p60
      $region14: #{down_forward.1} parent=11 // pred_check_branch
        %208 = sbr.rel (%p206) target = $region16
      $region15: #{down_forward.1} parent=11 // pred_region
        _
      $region16: #{down_forward.1} parent=11 // pred_fallthru
        _
      // Predicated region
      $region17: #{down_forward.1} parent=11 // pred_check
        %p209 = pneg %p81
      $region18: #{down_forward.1} parent=11 // pred_check_branch
        %211 = sbr.rel (%p209) target = $region20
      $region19: #{down_forward.1} parent=11 // pred_region
        _
      $region20: #{down_forward.1} parent=11 // pred_fallthru
        _
      // Predicated region
      $region21: #{down_forward.1} parent=11 // pred_check
        %p212 = pneg %p102
      $region22: #{down_forward.1} parent=11 // pred_check_branch
        %214 = sbr.rel (%p212) target = $region24
      $region23: #{down_forward.1} parent=11 // pred_region
        _
      $region24: #{down_forward.1} parent=11 // pred_fallthru
        _
      // Predicated region
      $region25: #{down_forward.1} parent=11 // pred_check
        %p215 = pneg %p123
      $region26: #{down_forward.1} parent=11 // pred_check_branch
        %217 = sbr.rel (%p215) target = $region28
      $region27: #{down_forward.1} parent=11 // pred_region
        _
      $region28: #{down_forward.1} parent=11 // pred_fallthru
        _
      // Predicated region
      $region29: #{down_forward.1} parent=11 // pred_check
        %p218 = pneg %p144
      $region30: #{down_forward.1} parent=11 // pred_check_branch
        %220 = sbr.rel (%p218) target = $region32
      $region31: #{down_forward.1} parent=11 // pred_region
        _
      $region32: #{down_forward.1} parent=11 // pred_fallthru
        _
      // Predicated region
      $region33: #{down_forward.1} parent=11 // pred_check
        %p221 = pneg %p165
      $region34: #{down_forward.1} parent=11 // pred_check_branch
        %223 = sbr.rel (%p221) target = $region36
      $region35: #{down_forward.1} parent=11 // pred_region
        _
      $region36: #{down_forward.1} parent=11 // pred_fallthru
        _
    $region12: #{down_forward.1} parent=5 // pred_fallthru
      _
    %p224 = scmp.lt.s32.totalorder %s13, 2
    // Predicated region
    $region37: #{down_forward.1} parent=5 // pred_check
      %p225 = pneg %p224
    $region38: #{down_forward.1} parent=5 // pred_check_branch
      %227 = sbr.rel (%p225) target = $region40
    $region39: #{down_forward.1} parent=5 // pred_region
      // Predicated region
      $region41: #{down_forward.1} parent=39 // pred_check
        %p228 = pneg %p33
      $region42: #{down_forward.1} parent=39 // pred_check_branch
        %230 = sbr.rel (%p228) target = $region44
      $region43: #{down_forward.1} parent=39 // pred_region
        %p231 = scmp.lt.s32.totalorder %s13, 1
        %s232 = scalar_select %p231, %s13, 1
        %s233 = smul.addr %s232, 16
        %s234 = smul.addr %s233, 8
        %s235 = scalar_lea.vmem %s0, %s234
      $region44: #{down_forward.1} parent=39 // pred_fallthru
        _
    $region40: #{down_forward.1} parent=5 // pred_fallthru
      _
    %p236 = scmp.le.s32.totalorder 1, %s13
    %p237 = scmp.lt.s32.totalorder %s13, 3
    %p238 = pnand %p236, %p237
    %p239 = pneg %p238
    // Predicated region
    $region45: #{down_forward.1} parent=5 // pred_check
      _
    $region46: #{down_forward.1} parent=5 // pred_check_branch
      %241 = sbr.rel (%p238) target = $region48
    $region47: #{down_forward.1} parent=5 // pred_region
      %s242 = ssub.s32 %s13, 1
      %p243 = scmp.lt.s32.totalorder %s18, 1
      %s244 = scalar_select %p243, %s18, 1
      %s245 = smul.addr %s244, 16
      %s246 = smul.addr %s245, 8
      %s247 = scalar_lea.vmem %s0, %s246
      %p248 = pneg %p39
      %p249 = pneg %p36
      %p250 = pneg %p60
      %p251 = pneg %p57
      %p252 = pneg %p81
      %p253 = pneg %p78
      %p254 = pneg %p102
      %p255 = pneg %p99
      %p256 = pneg %p123
      %p257 = pneg %p120
      %p258 = pneg %p144
      %p259 = pneg %p141
      %p260 = pneg %p165
      %p261 = pneg %p162
      %p262 = pneg %p191
      %p263 = pneg %p188
      %p264 = scmp.lt.s32.totalorder %s18, 1
      %s265 = scalar_select %p264, %s18, 1
      %s266 = smul.addr %s265, 8
      %s267 = smul.addr %s266, 8
      %s268 = scalar_lea.vmem %s7, %s267
      %p269 = scmp.lt.s32.totalorder %s18, 1
      %s270 = scalar_select %p269, %s18, 1
      %s271 = smul.addr %s270, 16
      %s272 = smul.addr %s271, 8
      %s273 = scalar_lea.vmem %s0, %s272
      %p274 = scmp.lt.s32.totalorder %s18, 1
      %s275 = scalar_select %p274, %s18, 1
      %s276 = smul.addr %s275, 8
      %s277 = smul.addr %s276, 8
      %s278 = scalar_lea.vmem %s7, %s277
      %v279 = vld [vmem:[%s273] sm:$0xff]
      %v280 = vld [vmem:[%s273 + $0x8] sm:$0xff]
      %v281 = vld [vmem:[%s273 + $0x10] sm:$0xff]
      %v282 = vld [vmem:[%s273 + $0x18] sm:$0xff]
      %v283 = vld [vmem:[%s273 + $0x20] sm:$0xff]
      %v284 = vld [vmem:[%s273 + $0x28] sm:$0xff]
      %v285 = vld [vmem:[%s273 + $0x30] sm:$0xff]
      %v286 = vld [vmem:[%s273 + $0x38] sm:$0xff]
      %v287 = vld [vmem:[%s273 + $0x40] sm:$0xff]
      %v288 = vld [vmem:[%s273 + $0x48] sm:$0xff]
      %v289 = vld [vmem:[%s273 + $0x50] sm:$0xff]
      %v290 = vld [vmem:[%s273 + $0x58] sm:$0xff]
      %v291 = vld [vmem:[%s273 + $0x60] sm:$0xff]
      %v292 = vld [vmem:[%s273 + $0x68] sm:$0xff]
      %v293 = vld [vmem:[%s273 + $0x70] sm:$0xff]
      %v294 = vld [vmem:[%s273 + $0x78] sm:$0xff]
      %v295 = vmax.f32 %v279, %v280
      %v296 = vmax.f32 %v281, %v282
      %v297 = vmax.f32 %v283, %v284
      %v298 = vmax.f32 %v285, %v286
      %v299 = vmax.f32 %v287, %v288
      %v300 = vmax.f32 %v289, %v290
      %v301 = vmax.f32 %v291, %v292
      %v302 = vmax.f32 %v293, %v294
      %311 = vrot.lane.b32.xlu0 %v295, 124
      %v312 = vpop.permute.xlu0 %311
      %313 = vrot.lane.b32.xlu0 %v296, 124
      %v314 = vpop.permute.xlu0 %313
      %315 = vrot.lane.b32.xlu0 %v297, 124
      %v316 = vpop.permute.xlu0 %315
      %317 = vrot.lane.b32.xlu0 %v298, 124
      %v318 = vpop.permute.xlu0 %317
      %319 = vrot.lane.b32.xlu0 %v299, 124
      %v320 = vpop.permute.xlu0 %319
      %321 = vrot.lane.b32.xlu0 %v300, 124
      %v322 = vpop.permute.xlu0 %321
      %323 = vrot.lane.b32.xlu0 %v301, 124
      %v324 = vpop.permute.xlu0 %323
      %325 = vrot.lane.b32.xlu0 %v302, 124
      %v326 = vpop.permute.xlu0 %325
      %v335 = vmax.f32 %v295, %v312
      %v336 = vmax.f32 %v296, %v314
      %v337 = vmax.f32 %v297, %v316
      %v338 = vmax.f32 %v298, %v318
      %v339 = vmax.f32 %v299, %v320
      %v340 = vmax.f32 %v300, %v322
      %v341 = vmax.f32 %v301, %v324
      %v342 = vmax.f32 %v302, %v326
      %v343 = vadd.f32 %v279, %v280
      %v344 = vadd.f32 %v281, %v282
      %v345 = vadd.f32 %v283, %v284
      %v346 = vadd.f32 %v285, %v286
      %v347 = vadd.f32 %v287, %v288
      %v348 = vadd.f32 %v289, %v290
      %v349 = vadd.f32 %v291, %v292
      %v350 = vadd.f32 %v293, %v294
      %359 = vrot.lane.b32.xlu0 %v343, 4
      %v360 = vpop.permute.xlu0 %359
      %361 = vrot.lane.b32.xlu0 %v344, 4
      %v362 = vpop.permute.xlu0 %361
      %363 = vrot.lane.b32.xlu0 %v345, 4
      %v364 = vpop.permute.xlu0 %363
      %365 = vrot.lane.b32.xlu0 %v346, 4
      %v366 = vpop.permute.xlu0 %365
      %367 = vrot.lane.b32.xlu0 %v347, 4
      %v368 = vpop.permute.xlu0 %367
      %369 = vrot.lane.b32.xlu0 %v348, 4
      %v370 = vpop.permute.xlu0 %369
      %371 = vrot.lane.b32.xlu0 %v349, 4
      %v372 = vpop.permute.xlu0 %371
      %373 = vrot.lane.b32.xlu0 %v350, 4
      %v374 = vpop.permute.xlu0 %373
      %vm383 = vcmask 31744
      %v384 = vsel %vm383, %v335, %v360
      %v385 = vsel %vm383, %v336, %v362
      %v386 = vsel %vm383, %v337, %v364
      %v387 = vsel %vm383, %v338, %v366
      %v388 = vsel %vm383, %v339, %v368
      %v389 = vsel %vm383, %v340, %v370
      %v390 = vsel %vm383, %v341, %v372
      %v391 = vsel %vm383, %v342, %v374
      %v392 = vld [vmem:[%s1] sm:$0xff]
      %v393 = vld [vmem:[%s1 + $0x8] sm:$0xf]
      %v394 = vld [vmem:[%s2] sm:$0x1]
      %v396 = vlaneseq
      %v397 = vshrl.u32 %v396, 7
      %v398 = vsub.s32 0, %v397
      %v399 = vrot.slane %v394, %v398
      %vm401 = vcmask 97280
      %v403 = vsel %vm401, %v384, 0
      %v406 = vsel %vm401, %v385, 0
      %v409 = vsel %vm401, %v386, 0
      %v412 = vsel %vm401, %v387, 0
      %v415 = vsel %vm401, %v388, 0
      %v418 = vsel %vm401, %v389, 0
      %v421 = vsel %vm401, %v390, 0
      %v424 = vsel %vm401, %v391, 0
      %vm426 = vcmask 1043456
      %v428 = vsel %vm426, %v393, 0
      %430 = vmatprep.subr.mxu0 0.0
      %431 = vmatpush1.msra.mxu0 %v392
      %432 = vmatprep.subr.mxu0 0.0
      %433 = vmatpush1.msra.mxu0 %v428
      %434 = vmatprep.subr.mxu0 0.0
      %435 = vmatpush1.msra.mxu0 0.0
      %436 = vmatprep.subr.mxu0 0.0
      %437 = vmatpush1.msra.mxu0 0.0
      %438 = vmatprep.subr.mxu0 0.0
      %439 = vmatpush1.msra.mxu0 0.0
      %440 = vmatprep.subr.mxu0 0.0
      %441 = vmatpush1.msra.mxu0 0.0
      %442 = vmatprep.subr.mxu0 0.0
      %443 = vmatpush1.msra.mxu0 0.0
      %444 = vmatprep.subr.mxu0 0.0
      %445 = vmatpush1.msra.mxu0 0.0
      %446 = vmatprep.subr.mxu0 0.0
      %447 = vmatpush1.msra.mxu0 0.0
      %448 = vmatprep.subr.mxu0 0.0
      %449 = vmatpush1.msra.mxu0 0.0
      %450 = vmatprep.subr.mxu0 0.0
      %451 = vmatpush1.msra.mxu0 0.0
      %452 = vmatprep.subr.mxu0 0.0
      %453 = vmatpush1.msra.mxu0 0.0
      %454 = vmatprep.subr.mxu0 0.0
      %455 = vmatpush1.msra.mxu0 0.0
      %456 = vmatprep.subr.mxu0 0.0
      %457 = vmatpush1.msra.mxu0 0.0
      %458 = vmatprep.subr.mxu0 0.0
      %459 = vmatpush1.msra.mxu0 0.0
      %460 = vmatprep.subr.mxu0 0.0
      %461 = vmatpush1.msra.mxu0 0.0
      %462 = vmatprep.subr.mxu0 0.0
      %463 = vmatpush1.msra.mxu0 0.0
      %464 = vmatprep.subr.mxu0 0.0
      %465 = vmatpush1.msra.mxu0 0.0
      %466 = vmatprep.subr.mxu0 0.0
      %467 = vmatpush1.msra.mxu0 0.0
      %468 = vmatprep.subr.mxu0 0.0
      %469 = vmatpush1.msra.mxu0 0.0
      %470 = vmatprep.subr.mxu0 0.0
      %471 = vmatpush1.msra.mxu0 0.0
      %472 = vmatprep.subr.mxu0 0.0
      %473 = vmatpush1.msra.mxu0 0.0
      %474 = vmatprep.subr.mxu0 0.0
      %475 = vmatpush1.msra.mxu0 0.0
      %476 = vmatprep.subr.mxu0 0.0
      %477 = vmatpush1.msra.mxu0 0.0
      %478 = vmatprep.subr.mxu0 0.0
      %479 = vmatpush1.msra.mxu0 0.0
      %480 = vmatprep.subr.mxu0 0.0
      %481 = vmatpush1.msra.mxu0 0.0
      %482 = vmatprep.subr.mxu0 0.0
      %483 = vmatpush1.msra.mxu0 0.0
      %484 = vmatprep.subr.mxu0 0.0
      %485 = vmatpush1.msra.mxu0 0.0
      %486 = vmatprep.subr.mxu0 0.0
      %487 = vmatpush1.msra.mxu0 0.0
      %488 = vmatprep.subr.mxu0 0.0
      %489 = vmatpush1.msra.mxu0 0.0
      %490 = vmatprep.subr.mxu0 0.0
      %491 = vmatpush1.msra.mxu0 0.0
      %492 = vmatprep.subr.mxu0 0.0
      %493 = vmatpush1.msra.mxu0 0.0
      %494 = vmatprep.mubr.f32.mxu0 0.0
      %495 = vmatmul.mubr.f32.gmra.mrb[0].mxu0 %v403
      %v496 = vpop.f32.mrb[0].mxu0
      %v497 = vadd.f32 %v399, %v496
      %v498 = vpop.f32.mrb[0].mxu0
      %499 = vmatprep.mubr.f32.mxu0 0.0
      %500 = vmatmul.mubr.f32.gmra.mrb[0].mxu0 %v406
      %v501 = vpop.f32.mrb[0].mxu0
      %v502 = vadd.f32 %v399, %v501
      %v503 = vpop.f32.mrb[0].mxu0
      %504 = vmatprep.mubr.f32.mxu0 0.0
      %505 = vmatmul.mubr.f32.gmra.mrb[0].mxu0 %v409
      %v506 = vpop.f32.mrb[0].mxu0
      %v507 = vadd.f32 %v399, %v506
      %v508 = vpop.f32.mrb[0].mxu0
      %509 = vmatprep.mubr.f32.mxu0 0.0
      %510 = vmatmul.mubr.f32.gmra.mrb[0].mxu0 %v412
      %v511 = vpop.f32.mrb[0].mxu0
      %v512 = vadd.f32 %v399, %v511
      %v513 = vpop.f32.mrb[0].mxu0
      %514 = vmatprep.mubr.f32.mxu0 0.0
      %515 = vmatmul.mubr.f32.gmra.mrb[0].mxu0 %v415
      %v516 = vpop.f32.mrb[0].mxu0
      %v517 = vadd.f32 %v399, %v516
      %v518 = vpop.f32.mrb[0].mxu0
      %519 = vmatprep.mubr.f32.mxu0 0.0
      %520 = vmatmul.mubr.f32.gmra.mrb[0].mxu0 %v418
      %v521 = vpop.f32.mrb[0].mxu0
      %v522 = vadd.f32 %v399, %v521
      %v523 = vpop.f32.mrb[0].mxu0
      %524 = vmatprep.mubr.f32.mxu0 0.0
      %525 = vmatmul.mubr.f32.gmra.mrb[0].mxu0 %v421
      %v526 = vpop.f32.mrb[0].mxu0
      %v527 = vadd.f32 %v399, %v526
      %v528 = vpop.f32.mrb[0].mxu0
      %529 = vmatprep.mubr.f32.mxu0 0.0
      %530 = vmatmul.mubr.f32.gmra.mrb[0].mxu0 %v424
      %v531 = vpop.f32.mrb[0].mxu0
      %v532 = vadd.f32 %v399, %v531
      %v533 = vpop.f32.mrb[0].mxu0
      %534 = vdwg.mxu0
      %535 = vst.msk [vmem:[#allocation2] sm:$0xff] %vm383, 0.0
      %vm536 = vcmask 25600
      %537 = vst.msk [vmem:[#allocation2 + $0x8] sm:$0x3] %vm536, 0.0
      %s538 = scalar_lea.vmem [#allocation2], 144
      %539 = vst.msk [vmem:[%s538] sm:$0xff] %vm383, 0.0
      %540 = vst.msk [vmem:[%s538 + $0x8] sm:$0x3] %vm536, 0.0
      %s541 = scalar_lea.vmem [#allocation2], 16
      %vm542 = vcmask 24576
      %543 = vst.msk [vmem:[%s541] sm:$0x1] %vm542, 0.0
      %544 = vst.msk [vmem:[%s541 + $0x10] sm:$0x1] %vm542, 0.0
      %545 = vst.msk [vmem:[%s541 + $0x20] sm:$0x1] %vm542, 0.0
      %546 = vst.msk [vmem:[%s541 + $0x30] sm:$0x1] %vm542, 0.0
      %547 = vst.msk [vmem:[%s541 + $0x40] sm:$0x1] %vm542, 0.0
      %548 = vst.msk [vmem:[%s541 + $0x50] sm:$0x1] %vm542, 0.0
      %549 = vst.msk [vmem:[%s541 + $0x60] sm:$0x1] %vm542, 0.0
      %550 = vst.msk [vmem:[%s541 + $0x70] sm:$0x1] %vm542, 0.0
      %551 = vst.msk [vmem:[%s541 + $0x9] sm:$0x1] %vm542, 0.0
      %552 = vst.msk [vmem:[%s541 + $0x19] sm:$0x1] %vm542, 0.0
      %553 = vst.msk [vmem:[%s541 + $0x29] sm:$0x1] %vm542, 0.0
      %554 = vst.msk [vmem:[%s541 + $0x39] sm:$0x1] %vm542, 0.0
      %555 = vst.msk [vmem:[%s541 + $0x49] sm:$0x1] %vm542, 0.0
      %556 = vst.msk [vmem:[%s541 + $0x59] sm:$0x1] %vm542, 0.0
      %557 = vst.msk [vmem:[%s541 + $0x69] sm:$0x1] %vm542, 0.0
      %558 = vst.msk [vmem:[%s541 + $0x79] sm:$0x1] %vm542, 0.0
      %559 = vst.msk [vmem:[%s541 + $0x1] sm:$0xff] %vm383, %v497
      %560 = vst.msk [vmem:[%s541 + $0x11] sm:$0xff] %vm383, %v502
      %561 = vst.msk [vmem:[%s541 + $0x21] sm:$0xff] %vm383, %v507
      %562 = vst.msk [vmem:[%s541 + $0x31] sm:$0xff] %vm383, %v512
      %563 = vst.msk [vmem:[%s541 + $0x41] sm:$0xff] %vm383, %v517
      %564 = vst.msk [vmem:[%s541 + $0x51] sm:$0xff] %vm383, %v522
      %565 = vst.msk [vmem:[%s541 + $0x61] sm:$0xff] %vm383, %v527
      %566 = vst.msk [vmem:[%s541 + $0x71] sm:$0xff] %vm383, %v532
      %v567 = vld [vmem:[#allocation2] sm:$0xff]
      %v568 = vld [vmem:[#allocation2 + $0x10] sm:$0xff]
      %v569 = vld [vmem:[#allocation2 + $0x20] sm:$0xff]
      %v570 = vld [vmem:[#allocation2 + $0x30] sm:$0xff]
      %v571 = vld [vmem:[#allocation2 + $0x40] sm:$0xff]
      %v572 = vld [vmem:[#allocation2 + $0x50] sm:$0xff]
      %v573 = vld [vmem:[#allocation2 + $0x60] sm:$0xff]
      %v574 = vld [vmem:[#allocation2 + $0x70] sm:$0xff]
      %v575 = vld [vmem:[#allocation2 + $0x1] sm:$0xff]
      %v576 = vld [vmem:[#allocation2 + $0x11] sm:$0xff]
      %v577 = vld [vmem:[#allocation2 + $0x21] sm:$0xff]
      %v578 = vld [vmem:[#allocation2 + $0x31] sm:$0xff]
      %v579 = vld [vmem:[#allocation2 + $0x41] sm:$0xff]
      %v580 = vld [vmem:[#allocation2 + $0x51] sm:$0xff]
      %v581 = vld [vmem:[#allocation2 + $0x61] sm:$0xff]
      %v582 = vld [vmem:[#allocation2 + $0x71] sm:$0xff]
      %v583 = vld [vmem:[#allocation2 + $0x2] sm:$0xff]
      %v584 = vld [vmem:[#allocation2 + $0x12] sm:$0xff]
      %v585 = vld [vmem:[#allocation2 + $0x22] sm:$0xff]
      %v586 = vld [vmem:[#allocation2 + $0x32] sm:$0xff]
      %v587 = vld [vmem:[#allocation2 + $0x42] sm:$0xff]
      %v588 = vld [vmem:[#allocation2 + $0x52] sm:$0xff]
      %v589 = vld [vmem:[#allocation2 + $0x62] sm:$0xff]
      %v590 = vld [vmem:[#allocation2 + $0x72] sm:$0xff]
      %v591 = vld [vmem:[%s541] sm:$0xff]
      %v592 = vld [vmem:[%s541 + $0x10] sm:$0xff]
      %v593 = vld [vmem:[%s541 + $0x20] sm:$0xff]
      %v594 = vld [vmem:[%s541 + $0x30] sm:$0xff]
      %v595 = vld [vmem:[%s541 + $0x40] sm:$0xff]
      %v596 = vld [vmem:[%s541 + $0x50] sm:$0xff]
      %v597 = vld [vmem:[%s541 + $0x60] sm:$0xff]
      %v598 = vld [vmem:[%s541 + $0x70] sm:$0xff]
      %v599 = vld [vmem:[%s541 + $0x1] sm:$0xff]
      %v600 = vld [vmem:[%s541 + $0x11] sm:$0xff]
      %v601 = vld [vmem:[%s541 + $0x21] sm:$0xff]
      %v602 = vld [vmem:[%s541 + $0x31] sm:$0xff]
      %v603 = vld [vmem:[%s541 + $0x41] sm:$0xff]
      %v604 = vld [vmem:[%s541 + $0x51] sm:$0xff]
      %v605 = vld [vmem:[%s541 + $0x61] sm:$0xff]
      %v606 = vld [vmem:[%s541 + $0x71] sm:$0xff]
      %v607 = vld [vmem:[%s541 + $0x2] sm:$0xff]
      %v608 = vld [vmem:[%s541 + $0x12] sm:$0xff]
      %v609 = vld [vmem:[%s541 + $0x22] sm:$0xff]
      %v610 = vld [vmem:[%s541 + $0x32] sm:$0xff]
      %v611 = vld [vmem:[%s541 + $0x42] sm:$0xff]
      %v612 = vld [vmem:[%s541 + $0x52] sm:$0xff]
      %v613 = vld [vmem:[%s541 + $0x62] sm:$0xff]
      %v614 = vld [vmem:[%s541 + $0x72] sm:$0xff]
      %s615 = scalar_lea.vmem [#allocation2], 32
      %v616 = vld [vmem:[%s615] sm:$0xff]
      %v617 = vld [vmem:[%s615 + $0x10] sm:$0xff]
      %v618 = vld [vmem:[%s615 + $0x20] sm:$0xff]
      %v619 = vld [vmem:[%s615 + $0x30] sm:$0xff]
      %v620 = vld [vmem:[%s615 + $0x40] sm:$0xff]
      %v621 = vld [vmem:[%s615 + $0x50] sm:$0xff]
      %v622 = vld [vmem:[%s615 + $0x60] sm:$0xff]
      %v623 = vld [vmem:[%s615 + $0x70] sm:$0xff]
      %v624 = vld [vmem:[%s615 + $0x1] sm:$0xff]
      %v625 = vld [vmem:[%s615 + $0x11] sm:$0xff]
      %v626 = vld [vmem:[%s615 + $0x21] sm:$0xff]
      %v627 = vld [vmem:[%s615 + $0x31] sm:$0xff]
      %v628 = vld [vmem:[%s615 + $0x41] sm:$0xff]
      %v629 = vld [vmem:[%s615 + $0x51] sm:$0xff]
      %v630 = vld [vmem:[%s615 + $0x61] sm:$0xff]
      %v631 = vld [vmem:[%s615 + $0x71] sm:$0xff]
      %v632 = vld [vmem:[%s615 + $0x2] sm:$0xff]
      %v633 = vld [vmem:[%s615 + $0x12] sm:$0xff]
      %v634 = vld [vmem:[%s615 + $0x22] sm:$0xff]
      %v635 = vld [vmem:[%s615 + $0x32] sm:$0xff]
      %v636 = vld [vmem:[%s615 + $0x42] sm:$0xff]
      %v637 = vld [vmem:[%s615 + $0x52] sm:$0xff]
      %v638 = vld [vmem:[%s615 + $0x62] sm:$0xff]
      %v639 = vld [vmem:[%s615 + $0x72] sm:$0xff]
      %648 = vrot.lane.b32.xlu0 %v575, 4
      %v649 = vpop.permute.xlu0 %648
      %650 = vrot.lane.b32.xlu0 %v576, 4
      %v651 = vpop.permute.xlu0 %650
      %652 = vrot.lane.b32.xlu0 %v577, 4
      %v653 = vpop.permute.xlu0 %652
      %654 = vrot.lane.b32.xlu0 %v578, 4
      %v655 = vpop.permute.xlu0 %654
      %656 = vrot.lane.b32.xlu0 %v579, 4
      %v657 = vpop.permute.xlu0 %656
      %658 = vrot.lane.b32.xlu0 %v580, 4
      %v659 = vpop.permute.xlu0 %658
      %660 = vrot.lane.b32.xlu0 %v581, 4
      %v661 = vpop.permute.xlu0 %660
      %662 = vrot.lane.b32.xlu0 %v582, 4
      %v663 = vpop.permute.xlu0 %662
      %680 = vrot.lane.b32.xlu0 %v583, 8
      %v681 = vpop.permute.xlu0 %680
      %682 = vrot.lane.b32.xlu0 %v584, 8
      %v683 = vpop.permute.xlu0 %682
      %684 = vrot.lane.b32.xlu0 %v585, 8
      %v685 = vpop.permute.xlu0 %684
      %686 = vrot.lane.b32.xlu0 %v586, 8
      %v687 = vpop.permute.xlu0 %686
      %688 = vrot.lane.b32.xlu0 %v587, 8
      %v689 = vpop.permute.xlu0 %688
      %690 = vrot.lane.b32.xlu0 %v588, 8
      %v691 = vpop.permute.xlu0 %690
      %692 = vrot.lane.b32.xlu0 %v589, 8
      %v693 = vpop.permute.xlu0 %692
      %694 = vrot.lane.b32.xlu0 %v590, 8
      %v695 = vpop.permute.xlu0 %694
      %712 = vrot.lane.b32.xlu0 %v591, 12
      %v713 = vpop.permute.xlu0 %712
      %714 = vrot.lane.b32.xlu0 %v592, 12
      %v715 = vpop.permute.xlu0 %714
      %716 = vrot.lane.b32.xlu0 %v593, 12
      %v717 = vpop.permute.xlu0 %716
      %718 = vrot.lane.b32.xlu0 %v594, 12
      %v719 = vpop.permute.xlu0 %718
      %720 = vrot.lane.b32.xlu0 %v595, 12
      %v721 = vpop.permute.xlu0 %720
      %722 = vrot.lane.b32.xlu0 %v596, 12
      %v723 = vpop.permute.xlu0 %722
      %724 = vrot.lane.b32.xlu0 %v597, 12
      %v725 = vpop.permute.xlu0 %724
      %726 = vrot.lane.b32.xlu0 %v598, 12
      %v727 = vpop.permute.xlu0 %726
      %744 = vrot.lane.b32.xlu0 %v599, 16
      %v745 = vpop.permute.xlu0 %744
      %746 = vrot.lane.b32.xlu0 %v600, 16
      %v747 = vpop.permute.xlu0 %746
      %748 = vrot.lane.b32.xlu0 %v601, 16
      %v749 = vpop.permute.xlu0 %748
      %750 = vrot.lane.b32.xlu0 %v602, 16
      %v751 = vpop.permute.xlu0 %750
      %752 = vrot.lane.b32.xlu0 %v603, 16
      %v753 = vpop.permute.xlu0 %752
      %754 = vrot.lane.b32.xlu0 %v604, 16
      %v755 = vpop.permute.xlu0 %754
      %756 = vrot.lane.b32.xlu0 %v605, 16
      %v757 = vpop.permute.xlu0 %756
      %758 = vrot.lane.b32.xlu0 %v606, 16
      %v759 = vpop.permute.xlu0 %758
      %776 = vrot.lane.b32.xlu0 %v607, 20
      %v777 = vpop.permute.xlu0 %776
      %778 = vrot.lane.b32.xlu0 %v608, 20
      %v779 = vpop.permute.xlu0 %778
      %780 = vrot.lane.b32.xlu0 %v609, 20
      %v781 = vpop.permute.xlu0 %780
      %782 = vrot.lane.b32.xlu0 %v610, 20
      %v783 = vpop.permute.xlu0 %782
      %784 = vrot.lane.b32.xlu0 %v611, 20
      %v785 = vpop.permute.xlu0 %784
      %786 = vrot.lane.b32.xlu0 %v612, 20
      %v787 = vpop.permute.xlu0 %786
      %788 = vrot.lane.b32.xlu0 %v613, 20
      %v789 = vpop.permute.xlu0 %788
      %790 = vrot.lane.b32.xlu0 %v614, 20
      %v791 = vpop.permute.xlu0 %790
      %808 = vrot.lane.b32.xlu0 %v616, 24
      %v809 = vpop.permute.xlu0 %808
      %810 = vrot.lane.b32.xlu0 %v617, 24
      %v811 = vpop.permute.xlu0 %810
      %812 = vrot.lane.b32.xlu0 %v618, 24
      %v813 = vpop.permute.xlu0 %812
      %814 = vrot.lane.b32.xlu0 %v619, 24
      %v815 = vpop.permute.xlu0 %814
      %816 = vrot.lane.b32.xlu0 %v620, 24
      %v817 = vpop.permute.xlu0 %816
      %818 = vrot.lane.b32.xlu0 %v621, 24
      %v819 = vpop.permute.xlu0 %818
      %820 = vrot.lane.b32.xlu0 %v622, 24
      %v821 = vpop.permute.xlu0 %820
      %822 = vrot.lane.b32.xlu0 %v623, 24
      %v823 = vpop.permute.xlu0 %822
      %840 = vrot.lane.b32.xlu0 %v624, 28
      %v841 = vpop.permute.xlu0 %840
      %842 = vrot.lane.b32.xlu0 %v625, 28
      %v843 = vpop.permute.xlu0 %842
      %844 = vrot.lane.b32.xlu0 %v626, 28
      %v845 = vpop.permute.xlu0 %844
      %846 = vrot.lane.b32.xlu0 %v627, 28
      %v847 = vpop.permute.xlu0 %846
      %848 = vrot.lane.b32.xlu0 %v628, 28
      %v849 = vpop.permute.xlu0 %848
      %850 = vrot.lane.b32.xlu0 %v629, 28
      %v851 = vpop.permute.xlu0 %850
      %852 = vrot.lane.b32.xlu0 %v630, 28
      %v853 = vpop.permute.xlu0 %852
      %854 = vrot.lane.b32.xlu0 %v631, 28
      %v855 = vpop.permute.xlu0 %854
      %872 = vrot.lane.b32.xlu0 %v632, 32
      %v873 = vpop.permute.xlu0 %872
      %874 = vrot.lane.b32.xlu0 %v633, 32
      %v875 = vpop.permute.xlu0 %874
      %876 = vrot.lane.b32.xlu0 %v634, 32
      %v877 = vpop.permute.xlu0 %876
      %878 = vrot.lane.b32.xlu0 %v635, 32
      %v879 = vpop.permute.xlu0 %878
      %880 = vrot.lane.b32.xlu0 %v636, 32
      %v881 = vpop.permute.xlu0 %880
      %882 = vrot.lane.b32.xlu0 %v637, 32
      %v883 = vpop.permute.xlu0 %882
      %884 = vrot.lane.b32.xlu0 %v638, 32
      %v885 = vpop.permute.xlu0 %884
      %886 = vrot.lane.b32.xlu0 %v639, 32
      %v887 = vpop.permute.xlu0 %886
      %v896 = vsel %vm383, %v567, %v649
      %v897 = vsel %vm383, %v568, %v651
      %v898 = vsel %vm383, %v569, %v653
      %v899 = vsel %vm383, %v570, %v655
      %v900 = vsel %vm383, %v571, %v657
      %v901 = vsel %vm383, %v572, %v659
      %v902 = vsel %vm383, %v573, %v661
      %v903 = vsel %vm383, %v574, %v663
      %vm904 = vcmask 64512
      %v905 = vsel %vm904, %v896, %v681
      %v906 = vsel %vm904, %v897, %v683
      %v907 = vsel %vm904, %v898, %v685
      %v908 = vsel %vm904, %v899, %v687
      %v909 = vsel %vm904, %v900, %v689
      %v910 = vsel %vm904, %v901, %v691
      %v911 = vsel %vm904, %v902, %v693
      %v912 = vsel %vm904, %v903, %v695
      %v913 = vsel %vm401, %v905, %v713
      %v914 = vsel %vm401, %v906, %v715
      %v915 = vsel %vm401, %v907, %v717
      %v916 = vsel %vm401, %v908, %v719
      %v917 = vsel %vm401, %v909, %v721
      %v918 = vsel %vm401, %v910, %v723
      %v919 = vsel %vm401, %v911, %v725
      %v920 = vsel %vm401, %v912, %v727
      %vm921 = vcmask 130048
      %v922 = vsel %vm921, %v913, %v745
      %v923 = vsel %vm921, %v914, %v747
      %v924 = vsel %vm921, %v915, %v749
      %v925 = vsel %vm921, %v916, %v751
      %v926 = vsel %vm921, %v917, %v753
      %v927 = vsel %vm921, %v918, %v755
      %v928 = vsel %vm921, %v919, %v757
      %v929 = vsel %vm921, %v920, %v759
      %vm930 = vcmask 162816
      %v931 = vsel %vm930, %v922, %v777
      %v932 = vsel %vm930, %v923, %v779
      %v933 = vsel %vm930, %v924, %v781
      %v934 = vsel %vm930, %v925, %v783
      %v935 = vsel %vm930, %v926, %v785
      %v936 = vsel %vm930, %v927, %v787
      %v937 = vsel %vm930, %v928, %v789
      %v938 = vsel %vm930, %v929, %v791
      %vm939 = vcmask 195584
      %v940 = vsel %vm939, %v931, %v809
      %v941 = vsel %vm939, %v932, %v811
      %v942 = vsel %vm939, %v933, %v813
      %v943 = vsel %vm939, %v934, %v815
      %v944 = vsel %vm939, %v935, %v817
      %v945 = vsel %vm939, %v936, %v819
      %v946 = vsel %vm939, %v937, %v821
      %v947 = vsel %vm939, %v938, %v823
      %vm948 = vcmask 228352
      %v949 = vsel %vm948, %v940, %v841
      %v950 = vsel %vm948, %v941, %v843
      %v951 = vsel %vm948, %v942, %v845
      %v952 = vsel %vm948, %v943, %v847
      %v953 = vsel %vm948, %v944, %v849
      %v954 = vsel %vm948, %v945, %v851
      %v955 = vsel %vm948, %v946, %v853
      %v956 = vsel %vm948, %v947, %v855
      %vm957 = vcmask 261120
      %v958 = vsel %vm957, %v949, %v873
      %v959 = vsel %vm957, %v950, %v875
      %v960 = vsel %vm957, %v951, %v877
      %v961 = vsel %vm957, %v952, %v879
      %v962 = vsel %vm957, %v953, %v881
      %v963 = vsel %vm957, %v954, %v883
      %v964 = vsel %vm957, %v955, %v885
      %v965 = vsel %vm957, %v956, %v887
      %v966 = vld [vmem:[%s3] sm:$0xff]
      %v967 = vld [vmem:[%s3 + $0x8] sm:$0xff]
      %v968 = vld [vmem:[%s3 + $0x10] sm:$0xff]
      %v969 = vld [vmem:[%s3 + $0x18] sm:$0xff]
      %v970 = vld [vmem:[%s3 + $0x20] sm:$0xf]
      %v971 = vld [vmem:[%s4] sm:$0x1]
      %v973 = vlaneseq
      %v974 = vshrl.u32 %v973, 7
      %v975 = vsub.s32 0, %v974
      %v976 = vrot.slane %v971, %v975
      %vm978 = vcmask 293888
      %v980 = vsel %vm978, %v958, 0
      %v983 = vsel %vm978, %v959, 0
      %v986 = vsel %vm978, %v960, 0
      %v989 = vsel %vm978, %v961, 0
      %v992 = vsel %vm978, %v962, 0
      %v995 = vsel %vm978, %v963, 0
      %v998 = vsel %vm978, %v964, 0
      %v1001 = vsel %vm978, %v965, 0
      %v1004 = vsel %vm426, %v970, 0
      %1006 = vmatprep.subr.mxu0 0.0
      %1007 = vmatpush1.msra.mxu0 %v966
      %1008 = vmatprep.subr.mxu0 0.0
      %1009 = vmatpush1.msra.mxu0 %v967
      %1010 = vmatprep.subr.mxu0 0.0
      %1011 = vmatpush1.msra.mxu0 %v968
      %1012 = vmatprep.subr.mxu0 0.0
      %1013 = vmatpush1.msra.mxu0 %v969
      %1014 = vmatprep.subr.mxu0 0.0
      %1015 = vmatpush1.msra.mxu0 %v1004
      %1016 = vmatprep.subr.mxu0 0.0
      %1017 = vmatpush1.msra.mxu0 0.0
      %1018 = vmatprep.subr.mxu0 0.0
      %1019 = vmatpush1.msra.mxu0 0.0
      %1020 = vmatprep.subr.mxu0 0.0
      %1021 = vmatpush1.msra.mxu0 0.0
      %1022 = vmatprep.subr.mxu0 0.0
      %1023 = vmatpush1.msra.mxu0 0.0
      %1024 = vmatprep.subr.mxu0 0.0
      %1025 = vmatpush1.msra.mxu0 0.0
      %1026 = vmatprep.subr.mxu0 0.0
      %1027 = vmatpush1.msra.mxu0 0.0
      %1028 = vmatprep.subr.mxu0 0.0
      %1029 = vmatpush1.msra.mxu0 0.0
      %1030 = vmatprep.subr.mxu0 0.0
      %1031 = vmatpush1.msra.mxu0 0.0
      %1032 = vmatprep.subr.mxu0 0.0
      %1033 = vmatpush1.msra.mxu0 0.0
      %1034 = vmatprep.subr.mxu0 0.0
      %1035 = vmatpush1.msra.mxu0 0.0
      %1036 = vmatprep.subr.mxu0 0.0
      %1037 = vmatpush1.msra.mxu0 0.0
      %1038 = vmatprep.subr.mxu0 0.0
      %1039 = vmatpush1.msra.mxu0 0.0
      %1040 = vmatprep.subr.mxu0 0.0
      %1041 = vmatpush1.msra.mxu0 0.0
      %1042 = vmatprep.subr.mxu0 0.0
      %1043 = vmatpush1.msra.mxu0 0.0
      %1044 = vmatprep.subr.mxu0 0.0
      %1045 = vmatpush1.msra.mxu0 0.0
      %1046 = vmatprep.subr.mxu0 0.0
      %1047 = vmatpush1.msra.mxu0 0.0
      %1048 = vmatprep.subr.mxu0 0.0
      %1049 = vmatpush1.msra.mxu0 0.0
      %1050 = vmatprep.subr.mxu0 0.0
      %1051 = vmatpush1.msra.mxu0 0.0
      %1052 = vmatprep.subr.mxu0 0.0
      %1053 = vmatpush1.msra.mxu0 0.0
      %1054 = vmatprep.subr.mxu0 0.0
      %1055 = vmatpush1.msra.mxu0 0.0
      %1056 = vmatprep.subr.mxu0 0.0
      %1057 = vmatpush1.msra.mxu0 0.0
      %1058 = vmatprep.subr.mxu0 0.0
      %1059 = vmatpush1.msra.mxu0 0.0
      %1060 = vmatprep.subr.mxu0 0.0
      %1061 = vmatpush1.msra.mxu0 0.0
      %1062 = vmatprep.subr.mxu0 0.0
      %1063 = vmatpush1.msra.mxu0 0.0
      %1064 = vmatprep.subr.mxu0 0.0
      %1065 = vmatpush1.msra.mxu0 0.0
      %1066 = vmatprep.subr.mxu0 0.0
      %1067 = vmatpush1.msra.mxu0 0.0
      %1068 = vmatprep.subr.mxu0 0.0
      %1069 = vmatpush1.msra.mxu0 0.0
      %1070 = vmatprep.mubr.f32.mxu0 0.0
      %1071 = vmatmul.mubr.f32.gmra.mrb[0].mxu0 %v980
      %v1072 = vpop.f32.mrb[0].mxu0
      %v1073 = vadd.f32 %v976, %v1072
      %v1074 = vpop.f32.mrb[0].mxu0
      %1075 = vmatprep.mubr.f32.mxu0 0.0
      %1076 = vmatmul.mubr.f32.gmra.mrb[0].mxu0 %v983
      %v1077 = vpop.f32.mrb[0].mxu0
      %v1078 = vadd.f32 %v976, %v1077
      %v1079 = vpop.f32.mrb[0].mxu0
      %1080 = vmatprep.mubr.f32.mxu0 0.0
      %1081 = vmatmul.mubr.f32.gmra.mrb[0].mxu0 %v986
      %v1082 = vpop.f32.mrb[0].mxu0
      %v1083 = vadd.f32 %v976, %v1082
      %v1084 = vpop.f32.mrb[0].mxu0
      %1085 = vmatprep.mubr.f32.mxu0 0.0
      %1086 = vmatmul.mubr.f32.gmra.mrb[0].mxu0 %v989
      %v1087 = vpop.f32.mrb[0].mxu0
      %v1088 = vadd.f32 %v976, %v1087
      %v1089 = vpop.f32.mrb[0].mxu0
      %1090 = vmatprep.mubr.f32.mxu0 0.0
      %1091 = vmatmul.mubr.f32.gmra.mrb[0].mxu0 %v992
      %v1092 = vpop.f32.mrb[0].mxu0
      %v1093 = vadd.f32 %v976, %v1092
      %v1094 = vpop.f32.mrb[0].mxu0
      %1095 = vmatprep.mubr.f32.mxu0 0.0
      %1096 = vmatmul.mubr.f32.gmra.mrb[0].mxu0 %v995
      %v1097 = vpop.f32.mrb[0].mxu0
      %v1098 = vadd.f32 %v976, %v1097
      %v1099 = vpop.f32.mrb[0].mxu0
      %1100 = vmatprep.mubr.f32.mxu0 0.0
      %1101 = vmatmul.mubr.f32.gmra.mrb[0].mxu0 %v998
      %v1102 = vpop.f32.mrb[0].mxu0
      %v1103 = vadd.f32 %v976, %v1102
      %v1104 = vpop.f32.mrb[0].mxu0
      %1105 = vmatprep.mubr.f32.mxu0 0.0
      %1106 = vmatmul.mubr.f32.gmra.mrb[0].mxu0 %v1001
      %v1107 = vpop.f32.mrb[0].mxu0
      %v1108 = vadd.f32 %v976, %v1107
      %v1109 = vpop.f32.mrb[0].mxu0
      %1110 = vdwg.mxu0
      %v1111 = vmax.f32 %v1073, 0.0
      %v1112 = vmax.f32 %v1078, 0.0
      %v1113 = vmax.f32 %v1083, 0.0
      %v1114 = vmax.f32 %v1088, 0.0
      %v1115 = vmax.f32 %v1093, 0.0
      %v1116 = vmax.f32 %v1098, 0.0
      %v1117 = vmax.f32 %v1103, 0.0
      %v1118 = vmax.f32 %v1108, 0.0
      %1119 = vst.msk [vmem:[#allocation3] sm:$0xff] %vm904, 0.0
      %vm1120 = vcmask 58368
      %1121 = vst.msk [vmem:[#allocation3 + $0x8] sm:$0x3] %vm1120, 0.0
      %s1122 = scalar_lea.vmem [#allocation3], 144
      %1123 = vst.msk [vmem:[%s1122] sm:$0xff] %vm904, 0.0
      %1124 = vst.msk [vmem:[%s1122 + $0x8] sm:$0x3] %vm1120, 0.0
      %s1125 = scalar_lea.vmem [#allocation3], 16
      %vm1126 = vcmask 57344
      %1127 = vst.msk [vmem:[%s1125] sm:$0x1] %vm1126, 0.0
      %1128 = vst.msk [vmem:[%s1125 + $0x10] sm:$0x1] %vm1126, 0.0
      %1129 = vst.msk [vmem:[%s1125 + $0x20] sm:$0x1] %vm1126, 0.0
      %1130 = vst.msk [vmem:[%s1125 + $0x30] sm:$0x1] %vm1126, 0.0
      %1131 = vst.msk [vmem:[%s1125 + $0x40] sm:$0x1] %vm1126, 0.0
      %1132 = vst.msk [vmem:[%s1125 + $0x50] sm:$0x1] %vm1126, 0.0
      %1133 = vst.msk [vmem:[%s1125 + $0x60] sm:$0x1] %vm1126, 0.0
      %1134 = vst.msk [vmem:[%s1125 + $0x70] sm:$0x1] %vm1126, 0.0
      %1135 = vst.msk [vmem:[%s1125 + $0x9] sm:$0x1] %vm1126, 0.0
      %1136 = vst.msk [vmem:[%s1125 + $0x19] sm:$0x1] %vm1126, 0.0
      %1137 = vst.msk [vmem:[%s1125 + $0x29] sm:$0x1] %vm1126, 0.0
      %1138 = vst.msk [vmem:[%s1125 + $0x39] sm:$0x1] %vm1126, 0.0
      %1139 = vst.msk [vmem:[%s1125 + $0x49] sm:$0x1] %vm1126, 0.0
      %1140 = vst.msk [vmem:[%s1125 + $0x59] sm:$0x1] %vm1126, 0.0
      %1141 = vst.msk [vmem:[%s1125 + $0x69] sm:$0x1] %vm1126, 0.0
      %1142 = vst.msk [vmem:[%s1125 + $0x79] sm:$0x1] %vm1126, 0.0
      %1143 = vst.msk [vmem:[%s1125 + $0x1] sm:$0xff] %vm904, %v1111
      %1144 = vst.msk [vmem:[%s1125 + $0x11] sm:$0xff] %vm904, %v1112
      %1145 = vst.msk [vmem:[%s1125 + $0x21] sm:$0xff] %vm904, %v1113
      %1146 = vst.msk [vmem:[%s1125 + $0x31] sm:$0xff] %vm904, %v1114
      %1147 = vst.msk [vmem:[%s1125 + $0x41] sm:$0xff] %vm904, %v1115
      %1148 = vst.msk [vmem:[%s1125 + $0x51] sm:$0xff] %vm904, %v1116
      %1149 = vst.msk [vmem:[%s1125 + $0x61] sm:$0xff] %vm904, %v1117
      %1150 = vst.msk [vmem:[%s1125 + $0x71] sm:$0xff] %vm904, %v1118
      %v1151 = vld [vmem:[#allocation3] sm:$0xff]
      %v1152 = vld [vmem:[#allocation3 + $0x10] sm:$0xff]
      %v1153 = vld [vmem:[#allocation3 + $0x20] sm:$0xff]
      %v1154 = vld [vmem:[#allocation3 + $0x30] sm:$0xff]
      %v1155 = vld [vmem:[#allocation3 + $0x40] sm:$0xff]
      %v1156 = vld [vmem:[#allocation3 + $0x50] sm:$0xff]
      %v1157 = vld [vmem:[#allocation3 + $0x60] sm:$0xff]
      %v1158 = vld [vmem:[#allocation3 + $0x70] sm:$0xff]
      %v1159 = vld [vmem:[#allocation3 + $0x1] sm:$0xff]
      %v1160 = vld [vmem:[#allocation3 + $0x11] sm:$0xff]
      %v1161 = vld [vmem:[#allocation3 + $0x21] sm:$0xff]
      %v1162 = vld [vmem:[#allocation3 + $0x31] sm:$0xff]
      %v1163 = vld [vmem:[#allocation3 + $0x41] sm:$0xff]
      %v1164 = vld [vmem:[#allocation3 + $0x51] sm:$0xff]
      %v1165 = vld [vmem:[#allocation3 + $0x61] sm:$0xff]
      %v1166 = vld [vmem:[#allocation3 + $0x71] sm:$0xff]
      %v1167 = vld [vmem:[#allocation3 + $0x2] sm:$0xff]
      %v1168 = vld [vmem:[#allocation3 + $0x12] sm:$0xff]
      %v1169 = vld [vmem:[#allocation3 + $0x22] sm:$0xff]
      %v1170 = vld [vmem:[#allocation3 + $0x32] sm:$0xff]
      %v1171 = vld [vmem:[#allocation3 + $0x42] sm:$0xff]
      %v1172 = vld [vmem:[#allocation3 + $0x52] sm:$0xff]
      %v1173 = vld [vmem:[#allocation3 + $0x62] sm:$0xff]
      %v1174 = vld [vmem:[#allocation3 + $0x72] sm:$0xff]
      %v1175 = vld [vmem:[%s1125] sm:$0xff]
      %v1176 = vld [vmem:[%s1125 + $0x10] sm:$0xff]
      %v1177 = vld [vmem:[%s1125 + $0x20] sm:$0xff]
      %v1178 = vld [vmem:[%s1125 + $0x30] sm:$0xff]
      %v1179 = vld [vmem:[%s1125 + $0x40] sm:$0xff]
      %v1180 = vld [vmem:[%s1125 + $0x50] sm:$0xff]
      %v1181 = vld [vmem:[%s1125 + $0x60] sm:$0xff]
      %v1182 = vld [vmem:[%s1125 + $0x70] sm:$0xff]
      %v1183 = vld [vmem:[%s1125 + $0x1] sm:$0xff]
      %v1184 = vld [vmem:[%s1125 + $0x11] sm:$0xff]
      %v1185 = vld [vmem:[%s1125 + $0x21] sm:$0xff]
      %v1186 = vld [vmem:[%s1125 + $0x31] sm:$0xff]
      %v1187 = vld [vmem:[%s1125 + $0x41] sm:$0xff]
      %v1188 = vld [vmem:[%s1125 + $0x51] sm:$0xff]
      %v1189 = vld [vmem:[%s1125 + $0x61] sm:$0xff]
      %v1190 = vld [vmem:[%s1125 + $0x71] sm:$0xff]
      %v1191 = vld [vmem:[%s1125 + $0x2] sm:$0xff]
      %v1192 = vld [vmem:[%s1125 + $0x12] sm:$0xff]
      %v1193 = vld [vmem:[%s1125 + $0x22] sm:$0xff]
      %v1194 = vld [vmem:[%s1125 + $0x32] sm:$0xff]
      %v1195 = vld [vmem:[%s1125 + $0x42] sm:$0xff]
      %v1196 = vld [vmem:[%s1125 + $0x52] sm:$0xff]
      %v1197 = vld [vmem:[%s1125 + $0x62] sm:$0xff]
      %v1198 = vld [vmem:[%s1125 + $0x72] sm:$0xff]
      %s1199 = scalar_lea.vmem [#allocation3], 32
      %v1200 = vld [vmem:[%s1199] sm:$0xff]
      %v1201 = vld [vmem:[%s1199 + $0x10] sm:$0xff]
      %v1202 = vld [vmem:[%s1199 + $0x20] sm:$0xff]
      %v1203 = vld [vmem:[%s1199 + $0x30] sm:$0xff]
      %v1204 = vld [vmem:[%s1199 + $0x40] sm:$0xff]
      %v1205 = vld [vmem:[%s1199 + $0x50] sm:$0xff]
      %v1206 = vld [vmem:[%s1199 + $0x60] sm:$0xff]
      %v1207 = vld [vmem:[%s1199 + $0x70] sm:$0xff]
      %v1208 = vld [vmem:[%s1199 + $0x1] sm:$0xff]
      %v1209 = vld [vmem:[%s1199 + $0x11] sm:$0xff]
      %v1210 = vld [vmem:[%s1199 + $0x21] sm:$0xff]
      %v1211 = vld [vmem:[%s1199 + $0x31] sm:$0xff]
      %v1212 = vld [vmem:[%s1199 + $0x41] sm:$0xff]
      %v1213 = vld [vmem:[%s1199 + $0x51] sm:$0xff]
      %v1214 = vld [vmem:[%s1199 + $0x61] sm:$0xff]
      %v1215 = vld [vmem:[%s1199 + $0x71] sm:$0xff]
      %v1216 = vld [vmem:[%s1199 + $0x2] sm:$0xff]
      %v1217 = vld [vmem:[%s1199 + $0x12] sm:$0xff]
      %v1218 = vld [vmem:[%s1199 + $0x22] sm:$0xff]
      %v1219 = vld [vmem:[%s1199 + $0x32] sm:$0xff]
      %v1220 = vld [vmem:[%s1199 + $0x42] sm:$0xff]
      %v1221 = vld [vmem:[%s1199 + $0x52] sm:$0xff]
      %v1222 = vld [vmem:[%s1199 + $0x62] sm:$0xff]
      %v1223 = vld [vmem:[%s1199 + $0x72] sm:$0xff]
      %1232 = vrot.lane.b32.xlu0 %v1159, 8
      %v1233 = vpop.permute.xlu0 %1232
      %1234 = vrot.lane.b32.xlu0 %v1160, 8
      %v1235 = vpop.permute.xlu0 %1234
      %1236 = vrot.lane.b32.xlu0 %v1161, 8
      %v1237 = vpop.permute.xlu0 %1236
      %1238 = vrot.lane.b32.xlu0 %v1162, 8
      %v1239 = vpop.permute.xlu0 %1238
      %1240 = vrot.lane.b32.xlu0 %v1163, 8
      %v1241 = vpop.permute.xlu0 %1240
      %1242 = vrot.lane.b32.xlu0 %v1164, 8
      %v1243 = vpop.permute.xlu0 %1242
      %1244 = vrot.lane.b32.xlu0 %v1165, 8
      %v1245 = vpop.permute.xlu0 %1244
      %1246 = vrot.lane.b32.xlu0 %v1166, 8
      %v1247 = vpop.permute.xlu0 %1246
      %1264 = vrot.lane.b32.xlu0 %v1167, 16
      %v1265 = vpop.permute.xlu0 %1264
      %1266 = vrot.lane.b32.xlu0 %v1168, 16
      %v1267 = vpop.permute.xlu0 %1266
      %1268 = vrot.lane.b32.xlu0 %v1169, 16
      %v1269 = vpop.permute.xlu0 %1268
      %1270 = vrot.lane.b32.xlu0 %v1170, 16
      %v1271 = vpop.permute.xlu0 %1270
      %1272 = vrot.lane.b32.xlu0 %v1171, 16
      %v1273 = vpop.permute.xlu0 %1272
      %1274 = vrot.lane.b32.xlu0 %v1172, 16
      %v1275 = vpop.permute.xlu0 %1274
      %1276 = vrot.lane.b32.xlu0 %v1173, 16
      %v1277 = vpop.permute.xlu0 %1276
      %1278 = vrot.lane.b32.xlu0 %v1174, 16
      %v1279 = vpop.permute.xlu0 %1278
      %1296 = vrot.lane.b32.xlu0 %v1175, 24
      %v1297 = vpop.permute.xlu0 %1296
      %1298 = vrot.lane.b32.xlu0 %v1176, 24
      %v1299 = vpop.permute.xlu0 %1298
      %1300 = vrot.lane.b32.xlu0 %v1177, 24
      %v1301 = vpop.permute.xlu0 %1300
      %1302 = vrot.lane.b32.xlu0 %v1178, 24
      %v1303 = vpop.permute.xlu0 %1302
      %1304 = vrot.lane.b32.xlu0 %v1179, 24
      %v1305 = vpop.permute.xlu0 %1304
      %1306 = vrot.lane.b32.xlu0 %v1180, 24
      %v1307 = vpop.permute.xlu0 %1306
      %1308 = vrot.lane.b32.xlu0 %v1181, 24
      %v1309 = vpop.permute.xlu0 %1308
      %1310 = vrot.lane.b32.xlu0 %v1182, 24
      %v1311 = vpop.permute.xlu0 %1310
      %1328 = vrot.lane.b32.xlu0 %v1183, 32
      %v1329 = vpop.permute.xlu0 %1328
      %1330 = vrot.lane.b32.xlu0 %v1184, 32
      %v1331 = vpop.permute.xlu0 %1330
      %1332 = vrot.lane.b32.xlu0 %v1185, 32
      %v1333 = vpop.permute.xlu0 %1332
      %1334 = vrot.lane.b32.xlu0 %v1186, 32
      %v1335 = vpop.permute.xlu0 %1334
      %1336 = vrot.lane.b32.xlu0 %v1187, 32
      %v1337 = vpop.permute.xlu0 %1336
      %1338 = vrot.lane.b32.xlu0 %v1188, 32
      %v1339 = vpop.permute.xlu0 %1338
      %1340 = vrot.lane.b32.xlu0 %v1189, 32
      %v1341 = vpop.permute.xlu0 %1340
      %1342 = vrot.lane.b32.xlu0 %v1190, 32
      %v1343 = vpop.permute.xlu0 %1342
      %1360 = vrot.lane.b32.xlu0 %v1191, 40
      %v1361 = vpop.permute.xlu0 %1360
      %1362 = vrot.lane.b32.xlu0 %v1192, 40
      %v1363 = vpop.permute.xlu0 %1362
      %1364 = vrot.lane.b32.xlu0 %v1193, 40
      %v1365 = vpop.permute.xlu0 %1364
      %1366 = vrot.lane.b32.xlu0 %v1194, 40
      %v1367 = vpop.permute.xlu0 %1366
      %1368 = vrot.lane.b32.xlu0 %v1195, 40
      %v1369 = vpop.permute.xlu0 %1368
      %1370 = vrot.lane.b32.xlu0 %v1196, 40
      %v1371 = vpop.permute.xlu0 %1370
      %1372 = vrot.lane.b32.xlu0 %v1197, 40
      %v1373 = vpop.permute.xlu0 %1372
      %1374 = vrot.lane.b32.xlu0 %v1198, 40
      %v1375 = vpop.permute.xlu0 %1374
      %1392 = vrot.lane.b32.xlu0 %v1200, 48
      %v1393 = vpop.permute.xlu0 %1392
      %1394 = vrot.lane.b32.xlu0 %v1201, 48
      %v1395 = vpop.permute.xlu0 %1394
      %1396 = vrot.lane.b32.xlu0 %v1202, 48
      %v1397 = vpop.permute.xlu0 %1396
      %1398 = vrot.lane.b32.xlu0 %v1203, 48
      %v1399 = vpop.permute.xlu0 %1398
      %1400 = vrot.lane.b32.xlu0 %v1204, 48
      %v1401 = vpop.permute.xlu0 %1400
      %1402 = vrot.lane.b32.xlu0 %v1205, 48
      %v1403 = vpop.permute.xlu0 %1402
      %1404 = vrot.lane.b32.xlu0 %v1206, 48
      %v1405 = vpop.permute.xlu0 %1404
      %1406 = vrot.lane.b32.xlu0 %v1207, 48
      %v1407 = vpop.permute.xlu0 %1406
      %1424 = vrot.lane.b32.xlu0 %v1208, 56
      %v1425 = vpop.permute.xlu0 %1424
      %1426 = vrot.lane.b32.xlu0 %v1209, 56
      %v1427 = vpop.permute.xlu0 %1426
      %1428 = vrot.lane.b32.xlu0 %v1210, 56
      %v1429 = vpop.permute.xlu0 %1428
      %1430 = vrot.lane.b32.xlu0 %v1211, 56
      %v1431 = vpop.permute.xlu0 %1430
      %1432 = vrot.lane.b32.xlu0 %v1212, 56
      %v1433 = vpop.permute.xlu0 %1432
      %1434 = vrot.lane.b32.xlu0 %v1213, 56
      %v1435 = vpop.permute.xlu0 %1434
      %1436 = vrot.lane.b32.xlu0 %v1214, 56
      %v1437 = vpop.permute.xlu0 %1436
      %1438 = vrot.lane.b32.xlu0 %v1215, 56
      %v1439 = vpop.permute.xlu0 %1438
      %1456 = vrot.lane.b32.xlu0 %v1216, 64
      %v1457 = vpop.permute.xlu0 %1456
      %1458 = vrot.lane.b32.xlu0 %v1217, 64
      %v1459 = vpop.permute.xlu0 %1458
      %1460 = vrot.lane.b32.xlu0 %v1218, 64
      %v1461 = vpop.permute.xlu0 %1460
      %1462 = vrot.lane.b32.xlu0 %v1219, 64
      %v1463 = vpop.permute.xlu0 %1462
      %1464 = vrot.lane.b32.xlu0 %v1220, 64
      %v1465 = vpop.permute.xlu0 %1464
      %1466 = vrot.lane.b32.xlu0 %v1221, 64
      %v1467 = vpop.permute.xlu0 %1466
      %1468 = vrot.lane.b32.xlu0 %v1222, 64
      %v1469 = vpop.permute.xlu0 %1468
      %1470 = vrot.lane.b32.xlu0 %v1223, 64
      %v1471 = vpop.permute.xlu0 %1470
      %v1480 = vsel %vm904, %v1151, %v1233
      %v1481 = vsel %vm904, %v1152, %v1235
      %v1482 = vsel %vm904, %v1153, %v1237
      %v1483 = vsel %vm904, %v1154, %v1239
      %v1484 = vsel %vm904, %v1155, %v1241
      %v1485 = vsel %vm904, %v1156, %v1243
      %v1486 = vsel %vm904, %v1157, %v1245
      %v1487 = vsel %vm904, %v1158, %v1247
      %v1488 = vsel %vm921, %v1480, %v1265
      %v1489 = vsel %vm921, %v1481, %v1267
      %v1490 = vsel %vm921, %v1482, %v1269
      %v1491 = vsel %vm921, %v1483, %v1271
      %v1492 = vsel %vm921, %v1484, %v1273
      %v1493 = vsel %vm921, %v1485, %v1275
      %v1494 = vsel %vm921, %v1486, %v1277
      %v1495 = vsel %vm921, %v1487, %v1279
      %v1496 = vsel %vm939, %v1488, %v1297
      %v1497 = vsel %vm939, %v1489, %v1299
      %v1498 = vsel %vm939, %v1490, %v1301
      %v1499 = vsel %vm939, %v1491, %v1303
      %v1500 = vsel %vm939, %v1492, %v1305
      %v1501 = vsel %vm939, %v1493, %v1307
      %v1502 = vsel %vm939, %v1494, %v1309
      %v1503 = vsel %vm939, %v1495, %v1311
      %v1504 = vsel %vm957, %v1496, %v1329
      %v1505 = vsel %vm957, %v1497, %v1331
      %v1506 = vsel %vm957, %v1498, %v1333
      %v1507 = vsel %vm957, %v1499, %v1335
      %v1508 = vsel %vm957, %v1500, %v1337
      %v1509 = vsel %vm957, %v1501, %v1339
      %v1510 = vsel %vm957, %v1502, %v1341
      %v1511 = vsel %vm957, %v1503, %v1343
      %vm1512 = vcmask 326656
      %v1513 = vsel %vm1512, %v1504, %v1361
      %v1514 = vsel %vm1512, %v1505, %v1363
      %v1515 = vsel %vm1512, %v1506, %v1365
      %v1516 = vsel %vm1512, %v1507, %v1367
      %v1517 = vsel %vm1512, %v1508, %v1369
      %v1518 = vsel %vm1512, %v1509, %v1371
      %v1519 = vsel %vm1512, %v1510, %v1373
      %v1520 = vsel %vm1512, %v1511, %v1375
      %vm1521 = vcmask 392192
      %v1522 = vsel %vm1521, %v1513, %v1393
      %v1523 = vsel %vm1521, %v1514, %v1395
      %v1524 = vsel %vm1521, %v1515, %v1397
      %v1525 = vsel %vm1521, %v1516, %v1399
      %v1526 = vsel %vm1521, %v1517, %v1401
      %v1527 = vsel %vm1521, %v1518, %v1403
      %v1528 = vsel %vm1521, %v1519, %v1405
      %v1529 = vsel %vm1521, %v1520, %v1407
      %vm1530 = vcmask 457728
      %v1531 = vsel %vm1530, %v1522, %v1425
      %v1532 = vsel %vm1530, %v1523, %v1427
      %v1533 = vsel %vm1530, %v1524, %v1429
      %v1534 = vsel %vm1530, %v1525, %v1431
      %v1535 = vsel %vm1530, %v1526, %v1433
      %v1536 = vsel %vm1530, %v1527, %v1435
      %v1537 = vsel %vm1530, %v1528, %v1437
      %v1538 = vsel %vm1530, %v1529, %v1439
      %vm1539 = vcmask 523264
      %v1540 = vsel %vm1539, %v1531, %v1457
      %v1541 = vsel %vm1539, %v1532, %v1459
      %v1542 = vsel %vm1539, %v1533, %v1461
      %v1543 = vsel %vm1539, %v1534, %v1463
      %v1544 = vsel %vm1539, %v1535, %v1465
      %v1545 = vsel %vm1539, %v1536, %v1467
      %v1546 = vsel %vm1539, %v1537, %v1469
      %v1547 = vsel %vm1539, %v1538, %v1471
      %v1548 = vld [vmem:[%s5] sm:$0xff]
      %v1549 = vld [vmem:[%s5 + $0x8] sm:$0xff]
      %v1550 = vld [vmem:[%s5 + $0x10] sm:$0xff]
      %v1551 = vld [vmem:[%s5 + $0x18] sm:$0xff]
      %v1552 = vld [vmem:[%s5 + $0x20] sm:$0xff]
      %v1553 = vld [vmem:[%s5 + $0x28] sm:$0xff]
      %v1554 = vld [vmem:[%s5 + $0x30] sm:$0xff]
      %v1555 = vld [vmem:[%s5 + $0x38] sm:$0xff]
      %v1556 = vld [vmem:[%s5 + $0x40] sm:$0xff]
      %v1557 = vld [vmem:[%s6] sm:$0x1]
      %v1559 = vlaneseq
      %v1560 = vshrl.u32 %v1559, 7
      %v1561 = vsub.s32 0, %v1560
      %v1562 = vrot.slane %v1557, %v1561
      %vm1564 = vcmask 588800
      %v1566 = vsel %vm1564, %v1540, 0
      %v1569 = vsel %vm1564, %v1541, 0
      %v1572 = vsel %vm1564, %v1542, 0
      %v1575 = vsel %vm1564, %v1543, 0
      %v1578 = vsel %vm1564, %v1544, 0
      %v1581 = vsel %vm1564, %v1545, 0
      %v1584 = vsel %vm1564, %v1546, 0
      %v1587 = vsel %vm1564, %v1547, 0
      %1589 = vmatprep.subr.mxu0 0.0
      %1590 = vmatpush1.msra.mxu0 %v1548
      %1591 = vmatprep.subr.mxu0 0.0
      %1592 = vmatpush1.msra.mxu0 %v1549
      %1593 = vmatprep.subr.mxu0 0.0
      %1594 = vmatpush1.msra.mxu0 %v1550
      %1595 = vmatprep.subr.mxu0 0.0
      %1596 = vmatpush1.msra.mxu0 %v1551
      %1597 = vmatprep.subr.mxu0 0.0
      %1598 = vmatpush1.msra.mxu0 %v1552
      %1599 = vmatprep.subr.mxu0 0.0
      %1600 = vmatpush1.msra.mxu0 %v1553
      %1601 = vmatprep.subr.mxu0 0.0
      %1602 = vmatpush1.msra.mxu0 %v1554
      %1603 = vmatprep.subr.mxu0 0.0
      %1604 = vmatpush1.msra.mxu0 %v1555
      %1605 = vmatprep.subr.mxu0 0.0
      %1606 = vmatpush1.msra.mxu0 %v1556
      %1607 = vmatprep.subr.mxu0 0.0
      %1608 = vmatpush1.msra.mxu0 0.0
      %1609 = vmatprep.subr.mxu0 0.0
      %1610 = vmatpush1.msra.mxu0 0.0
      %1611 = vmatprep.subr.mxu0 0.0
      %1612 = vmatpush1.msra.mxu0 0.0
      %1613 = vmatprep.subr.mxu0 0.0
      %1614 = vmatpush1.msra.mxu0 0.0
      %1615 = vmatprep.subr.mxu0 0.0
      %1616 = vmatpush1.msra.mxu0 0.0
      %1617 = vmatprep.subr.mxu0 0.0
      %1618 = vmatpush1.msra.mxu0 0.0
      %1619 = vmatprep.subr.mxu0 0.0
      %1620 = vmatpush1.msra.mxu0 0.0
      %1621 = vmatprep.subr.mxu0 0.0
      %1622 = vmatpush1.msra.mxu0 0.0
      %1623 = vmatprep.subr.mxu0 0.0
      %1624 = vmatpush1.msra.mxu0 0.0
      %1625 = vmatprep.subr.mxu0 0.0
      %1626 = vmatpush1.msra.mxu0 0.0
      %1627 = vmatprep.subr.mxu0 0.0
      %1628 = vmatpush1.msra.mxu0 0.0
      %1629 = vmatprep.subr.mxu0 0.0
      %1630 = vmatpush1.msra.mxu0 0.0
      %1631 = vmatprep.subr.mxu0 0.0
      %1632 = vmatpush1.msra.mxu0 0.0
      %1633 = vmatprep.subr.mxu0 0.0
      %1634 = vmatpush1.msra.mxu0 0.0
      %1635 = vmatprep.subr.mxu0 0.0
      %1636 = vmatpush1.msra.mxu0 0.0
      %1637 = vmatprep.subr.mxu0 0.0
      %1638 = vmatpush1.msra.mxu0 0.0
      %1639 = vmatprep.subr.mxu0 0.0
      %1640 = vmatpush1.msra.mxu0 0.0
      %1641 = vmatprep.subr.mxu0 0.0
      %1642 = vmatpush1.msra.mxu0 0.0
      %1643 = vmatprep.subr.mxu0 0.0
      %1644 = vmatpush1.msra.mxu0 0.0
      %1645 = vmatprep.subr.mxu0 0.0
      %1646 = vmatpush1.msra.mxu0 0.0
      %1647 = vmatprep.subr.mxu0 0.0
      %1648 = vmatpush1.msra.mxu0 0.0
      %1649 = vmatprep.subr.mxu0 0.0
      %1650 = vmatpush1.msra.mxu0 0.0
      %1651 = vmatprep.subr.mxu0 0.0
      %1652 = vmatpush1.msra.mxu0 0.0
      %1653 = vmatprep.mubr.f32.mxu0 0.0
      %1654 = vmatmul.mubr.f32.gmra.mrb[0].mxu0 %v1566
      %v1655 = vpop.f32.mrb[0].mxu0
      %v1656 = vadd.f32 %v1562, %v1655
      %v1657 = vpop.f32.mrb[0].mxu0
      %1658 = vmatprep.mubr.f32.mxu0 0.0
      %1659 = vmatmul.mubr.f32.gmra.mrb[0].mxu0 %v1569
      %v1660 = vpop.f32.mrb[0].mxu0
      %v1661 = vadd.f32 %v1562, %v1660
      %v1662 = vpop.f32.mrb[0].mxu0
      %1663 = vmatprep.mubr.f32.mxu0 0.0
      %1664 = vmatmul.mubr.f32.gmra.mrb[0].mxu0 %v1572
      %v1665 = vpop.f32.mrb[0].mxu0
      %v1666 = vadd.f32 %v1562, %v1665
      %v1667 = vpop.f32.mrb[0].mxu0
      %1668 = vmatprep.mubr.f32.mxu0 0.0
      %1669 = vmatmul.mubr.f32.gmra.mrb[0].mxu0 %v1575
      %v1670 = vpop.f32.mrb[0].mxu0
      %v1671 = vadd.f32 %v1562, %v1670
      %v1672 = vpop.f32.mrb[0].mxu0
      %1673 = vmatprep.mubr.f32.mxu0 0.0
      %1674 = vmatmul.mubr.f32.gmra.mrb[0].mxu0 %v1578
      %v1675 = vpop.f32.mrb[0].mxu0
      %v1676 = vadd.f32 %v1562, %v1675
      %v1677 = vpop.f32.mrb[0].mxu0
      %1678 = vmatprep.mubr.f32.mxu0 0.0
      %1679 = vmatmul.mubr.f32.gmra.mrb[0].mxu0 %v1581
      %v1680 = vpop.f32.mrb[0].mxu0
      %v1681 = vadd.f32 %v1562, %v1680
      %v1682 = vpop.f32.mrb[0].mxu0
      %1683 = vmatprep.mubr.f32.mxu0 0.0
      %1684 = vmatmul.mubr.f32.gmra.mrb[0].mxu0 %v1584
      %v1685 = vpop.f32.mrb[0].mxu0
      %v1686 = vadd.f32 %v1562, %v1685
      %v1687 = vpop.f32.mrb[0].mxu0
      %1688 = vmatprep.mubr.f32.mxu0 0.0
      %1689 = vmatmul.mubr.f32.gmra.mrb[0].mxu0 %v1587
      %v1690 = vpop.f32.mrb[0].mxu0
      %v1691 = vadd.f32 %v1562, %v1690
      %v1692 = vpop.f32.mrb[0].mxu0
      %1693 = vdwg.mxu0
      %v1694 = vmax.f32 %v1656, 0.0
      %v1695 = vmax.f32 %v1661, 0.0
      %v1696 = vmax.f32 %v1666, 0.0
      %v1697 = vmax.f32 %v1671, 0.0
      %v1698 = vmax.f32 %v1676, 0.0
      %v1699 = vmax.f32 %v1681, 0.0
      %v1700 = vmax.f32 %v1686, 0.0
      %v1701 = vmax.f32 %v1691, 0.0
      %1702 = vst.msk [vmem:[%s278] sm:$0xff] %vm904, %v1694
      %1703 = vst.msk [vmem:[%s278 + $0x8] sm:$0xff] %vm904, %v1695
      %1704 = vst.msk [vmem:[%s278 + $0x10] sm:$0xff] %vm904, %v1696
      %1705 = vst.msk [vmem:[%s278 + $0x18] sm:$0xff] %vm904, %v1697
      %1706 = vst.msk [vmem:[%s278 + $0x20] sm:$0xff] %vm904, %v1698
      %1707 = vst.msk [vmem:[%s278 + $0x28] sm:$0xff] %vm904, %v1699
      %1708 = vst.msk [vmem:[%s278 + $0x30] sm:$0xff] %vm904, %v1700
      %1709 = vst.msk [vmem:[%s278 + $0x38] sm:$0xff] %vm904, %v1701
      %p1710 = scmp.lt.s32.totalorder %s18, 1
      %s1711 = scalar_select %p1710, %s18, 1
      %s1712 = smul.addr %s1711, 8
      %s1713 = smul.addr %s1712, 8
      %s1714 = scalar_lea.vmem %s7, %s1713
      // Predicated region
      $region49: #{down_forward.1} parent=47 // pred_check
        %p1715 = pneg %p188
      $region50: #{down_forward.1} parent=47 // pred_check_branch
        %1717 = sbr.rel (%p1715) target = $region52
      $region51: #{down_forward.1} parent=47 // pred_region
        _
      $region52: #{down_forward.1} parent=47 // pred_fallthru
        _
    $region48: #{down_forward.1} parent=5 // pred_fallthru
      _
    %p1718 = scmp.le.s32.totalorder 2, %s13
    // Predicated region
    $region53: #{down_forward.1} parent=5 // pred_check
      %p1719 = pneg %p1718
    $region54: #{down_forward.1} parent=5 // pred_check_branch
      %1721 = sbr.rel (%p1719) target = $region56
    $region55: #{down_forward.1} parent=5 // pred_region
      %s1722 = ssub.s32 %s13, 2
      // Predicated region
      $region57: #{down_forward.1} parent=55 // pred_check
        %p1723 = pneg %p194
      $region58: #{down_forward.1} parent=55 // pred_check_branch
        %1725 = sbr.rel (%p1723) target = $region60
      $region59: #{down_forward.1} parent=55 // pred_region
        %p1726 = scmp.lt.s32.totalorder %s19, 1
        %s1727 = scalar_select %p1726, %s19, 1
        %s1728 = smul.addr %s1727, 8
        %s1729 = smul.addr %s1728, 8
        %s1730 = scalar_lea.vmem %s7, %s1729
      $region60: #{down_forward.1} parent=55 // pred_fallthru
        _
    $region56: #{down_forward.1} parent=5 // pred_fallthru
      _
  $region6: #{down_forward.1} parent=0 // loop_footer
    %s17 = sadd.s32 1, %s13
  $region7: #{down_forward.1} parent=0 // loop_footer_branch
    %12 = sbr.rel target = $region3
  $region8: #{down_forward.1} parent=0 // loop_exit
    _

</llo_original>
